<compile_context>
chip_gen: v7x
topology: tpu7x:2x2x1
jax: 0.10.0
libtpu: 0.0.40
codegen_flags: <defaults>
</compile_context>

<pallas_src>
import functools

import jax
import jax.numpy as jnp
from jax import lax
from jax.experimental import pallas as pl
from jax.experimental.pallas import tpu as pltpu

_NEG_INF = jnp.float32(-1e9)  # finite large-negative keeps padded rows NaN-free


# --------------------------------------------------------------------------
# Kernel
# --------------------------------------------------------------------------
def _attention_kernel(*refs, num_heads, head_dim, scale, q_tile,
                      has_mask, output_attentions):
    it = iter(refs)
    x_ref = next(it)                       # (1, Tp, D)  bf16
    wqkv_ref = next(it)                    # (D, 3D)     bf16 (VMEM resident)
    bqkv_ref = next(it)                    # (1, 3D)     f32
    wo_ref = next(it)                      # (D, D)      bf16
    bo_ref = next(it)                      # (1, D)      f32
    mask_ref = next(it) if has_mask else None            # (1, tq, Tp) f32
    out_ref = next(it)                     # (1, tq, D)
    probs_ref = next(it) if output_attentions else None  # (1, H, tq, Tp)
    q_scr = next(it)                       # (H, Tp, Dh) bf16
    k_scr = next(it)
    v_scr = next(it)

    d = num_heads * head_dim
    qi = pl.program_id(1)

    # ---- Fused QKV projection once per batch element; results persist in
    #      VMEM scratch across the (arbitrary) query-tile axis.
    @pl.when(qi == 0)
    def _project():
        x = x_ref[0]                                            # (Tp, D) bf16
        qkv = jnp.dot(x, wqkv_ref[...],
                      preferred_element_type=jnp.float32) + bqkv_ref[...]
        t_pad = x.shape[0]

        def to_heads(z):                                        # -> (H, Tp, Dh)
            return z.reshape(t_pad, num_heads, head_dim).transpose(1, 0, 2)

        q_scr[...] = to_heads(qkv[:, :d] * scale).astype(q_scr.dtype)
        k_scr[...] = to_heads(qkv[:, d:2 * d]).astype(k_scr.dtype)
        v_scr[...] = to_heads(qkv[:, 2 * d:]).astype(v_scr.dtype)

    # ---- Attention for this query tile, all heads batched on the MXU.
    q_start = pl.multiple_of(qi * q_tile, q_tile)
    q = q_scr[:, pl.ds(q_start, q_tile), :]                     # (H, tq, Dh)
    k = k_scr[...]                                              # (H, Tp, Dh)
    v = v_scr[...]                                              # (H, Tp, Dh)

    scores = lax.dot_general(q, k, (((2,), (2,)), ((0,), (0,))),
                             preferred_element_type=jnp.float32)  # (H, tq, Tp)
    if has_mask:
        scores = scores + mask_ref[...]                         # bcast over H

    s_max = jnp.max(scores, axis=-1, keepdims=True)
    e = jnp.exp(scores - s_max)
    denom = jnp.sum(e, axis=-1, keepdims=True)
    probs = e * pl.reciprocal(denom, approx=True)               # EUP slot

    if output_attentions:
        probs_ref[0] = probs.astype(probs_ref.dtype)

    # TODO(synk): dropout(attn_probs) skipped (identity in eval mode).
    ctx = lax.dot_general(probs.astype(v.dtype), v,
                          (((2,), (1,)), ((0,), (0,))),
                          preferred_element_type=jnp.float32)   # (H, tq, Dh)
    ctx = ctx.transpose(1, 0, 2).reshape(q_tile, d)             # (tq, D)

    out = jnp.dot(ctx.astype(wo_ref.dtype), wo_ref[...],
                  preferred_element_type=jnp.float32) + bo_ref[...]
    out_ref[0] = out.astype(out_ref.dtype)


# --------------------------------------------------------------------------
# Wrapper helpers
# --------------------------------------------------------------------------
def _round_up(x, m):
    return ((x + m - 1) // m) * m


def _pad_seq(t):
    # Lane-dense (x128) tiles for realistic sequence lengths (77 -> 128,
    # 485 -> 512); at least sublane-aligned (x8) for tiny ones.
    return _round_up(t, 8) if t <= 64 else _round_up(t, 128)


def _q_tile(t_pad):
    if t_pad <= 256:
        return t_pad
    for cand in (256, 128, 64, 32, 16, 8):
        if t_pad % cand == 0:
            return cand
    return t_pad


def _resident_spec(shape):
    """Constant-index block (fetched once); single-buffered when supported."""
    index_map = lambda i, qi: (0,) * len(shape)
    if hasattr(pl, "Buffered"):
        try:
            return pl.BlockSpec(shape, index_map, pipeline_mode=pl.Buffered(1))
        except TypeError:  # older jax without pipeline_mode kwarg
            pass
    return pl.BlockSpec(shape, index_map)


def _prepare_mask(attention_mask, causal_attention_mask, b, t, t_pad):
    """Combine HF-style masks (broadcastable to (B, T, T)) + padding mask."""
    mask = None
    for m in (causal_attention_mask, attention_mask):
        if m is None:
            continue
        m = jnp.asarray(m, jnp.float32)
        if m.ndim == 4:              # HF layout (bsz, 1, tgt, src)
            m = m[:, 0]
        m = jnp.broadcast_to(m, (b, t, t))
        mask = m if mask is None else mask + m
    if mask is None and t_pad == t:
        return None
    if mask is None:
        mask = jnp.zeros((b, t, t), jnp.float32)
    if t_pad != t:
        mask = jnp.pad(mask, ((0, 0), (0, t_pad - t), (0, t_pad - t)))
        key_is_pad = jnp.arange(t_pad) >= t
        mask = jnp.where(key_is_pad[None, None, :], _NEG_INF, mask)
    return mask


def _vmem_limit(t_pad, tq, d, h, has_mask, output_attentions, out_dt, probs_dt):
    bf16, f32 = 2, 4
    dh = d // h
    est = 0
    est += 2 * t_pad * d * bf16                       # x block (double-buffered)
    est += 3 * d * d * bf16 + 3 * d * f32             # fused QKV weight + bias
    est += d * d * bf16 + d * f32                     # out-proj weight + bias
    if has_mask:
        est += 2 * tq * t_pad * f32
    est += 2 * tq * d * jnp.dtype(out_dt).itemsize
    if output_attentions:
        est += 2 * h * tq * t_pad * jnp.dtype(probs_dt).itemsize
    est += 3 * h * t_pad * dh * bf16                  # q/k/v scratch
    est += 3 * t_pad * d * f32                        # projection temporaries
    est += 3 * h * tq * t_pad * f32                   # scores / exp / probs
    est += h * tq * dh * f32 + tq * d * f32           # ctx temporaries
    est = int(est * 1.5) + (4 << 20)
    return min(max(est, 8 << 20), 48 << 20)


# --------------------------------------------------------------------------
# Public entry point (mirrors PartCLIPSegAttention.forward)
# --------------------------------------------------------------------------
def partclipseg_attention(hidden_states, params, num_heads,
                          attention_mask=None, causal_attention_mask=None,
                          output_attentions=False,
                          compute_dtype=jnp.bfloat16):
    """hidden_states: (B, T, D). params: wq/bq/wk/bk/wv/bv/wo/bo with weights
    in (in_dim, out_dim) layout (= PyTorch weight.T). Masks in the HF layout
    (B, 1, T, T) or anything broadcastable to (B, T, T)."""
    b, t, d = hidden_states.shape
    if d % num_heads != 0:
        raise ValueError("embed_dim must be divisible by num_heads")
    dh = d // num_heads
    scale = dh ** -0.5
    out_dtype = hidden_states.dtype
    probs_dtype = hidden_states.dtype

    t_pad = _pad_seq(t)
    tq = _q_tile(t_pad)
    n_q = t_pad // tq

    mask = _prepare_mask(attention_mask, causal_attention_mask, b, t, t_pad)
    has_mask = mask is not None

    x = hidden_states.astype(compute_dtype)
    if t_pad != t:
        x = jnp.pad(x, ((0, 0), (0, t_pad - t), (0, 0)))

    w_qkv = jnp.concatenate([params["wq"], params["wk"], params["wv"]],
                            axis=1).astype(compute_dtype)            # (D, 3D)
    b_qkv = jnp.concatenate([params["bq"], params["bk"], params["bv"]]
                            ).reshape(1, 3 * d).astype(jnp.float32)
    w_o = params["wo"].astype(compute_dtype)
    b_o = params["bo"].reshape(1, d).astype(jnp.float32)

    in_specs = [
        pl.BlockSpec((1, t_pad, d), lambda i, qi: (i, 0, 0)),   # full-seq x
        _resident_spec((d, 3 * d)),
        _resident_spec((1, 3 * d)),
        _resident_spec((d, d)),
        _resident_spec((1, d)),
    ]
    inputs = [x, w_qkv, b_qkv, w_o, b_o]
    if has_mask:
        in_specs.append(pl.BlockSpec((1, tq, t_pad), lambda i, qi: (i, qi, 0)))
        inputs.append(mask)

    out_specs = [pl.BlockSpec((1, tq, d), lambda i, qi: (i, qi, 0))]
    out_shape = [jax.ShapeDtypeStruct((b, t_pad, d), out_dtype)]
    if output_attentions:
        out_specs.append(
            pl.BlockSpec((1, num_heads, tq, t_pad), lambda i, qi: (i, 0, qi, 0)))
        out_shape.append(
            jax.ShapeDtypeStruct((b, num_heads, t_pad, t_pad), probs_dtype))

    kernel = functools.partial(
        _attention_kernel, num_heads=num_heads, head_dim=dh, scale=scale,
        q_tile=tq, has_mask=has_mask, output_attentions=output_attentions)

    result = pl.pallas_call(
        kernel,
        grid=(b, n_q),
        in_specs=in_specs,
        out_specs=tuple(out_specs) if output_attentions else out_specs[0],
        out_shape=tuple(out_shape) if output_attentions else out_shape[0],
        scratch_shapes=[pltpu.VMEM((num_heads, t_pad, dh), compute_dtype)
                        for _ in range(3)],
        compiler_params=pltpu.CompilerParams(
            dimension_semantics=("parallel", "arbitrary"),
            vmem_limit_bytes=_vmem_limit(t_pad, tq, d, num_heads, has_mask,
                                         output_attentions, out_dtype,
                                         probs_dtype)),
    )(*inputs)

    if output_attentions:
        attn_out, probs = result
        return attn_out[:, :t], probs[:, :, :t, :t]
    return result[:, :t], None


# --------------------------------------------------------------------------
# Pure-JAX reference (matmul_dtype=bfloat16 mirrors the kernel's precision)
# --------------------------------------------------------------------------
def _reference(hidden_states, params, num_heads, attention_mask=None,
               causal_attention_mask=None, matmul_dtype=jnp.float32):
    b, t, d = hidden_states.shape
    dh = d // num_heads
    scale = dh ** -0.5
    x = hidden_states.astype(matmul_dtype)

    def proj(w, bias):
        return jnp.dot(x, w.astype(matmul_dtype),
                       preferred_element_type=jnp.float32) + bias

    q = proj(params["wq"], params["bq"]) * scale
    k = proj(params["wk"], params["bk"])
    v = proj(params["wv"], params["bv"])

    def split(z):
        return z.reshape(b, t, num_heads, dh).transpose(0, 2, 1, 3
                                                        ).astype(matmul_dtype)

    q, k, v = split(q), split(k), split(v)
    s = jnp.einsum("bhqd,bhkd->bhqk", q, k, preferred_element_type=jnp.float32)
    if causal_attention_mask is not None:
        s = s + jnp.asarray(causal_attention_mask, jnp.float32)
    if attention_mask is not None:
        s = s + jnp.asarray(attention_mask, jnp.float32)
    p = jax.nn.softmax(s, axis=-1)
    ctx = jnp.einsum("bhqk,bhkd->bhqd", p.astype(matmul_dtype), v,
                     preferred_element_type=jnp.float32)
    ctx = ctx.transpose(0, 2, 1, 3).reshape(b, t, d).astype(matmul_dtype)
    out = jnp.dot(ctx, params["wo"].astype(matmul_dtype),
                  preferred_element_type=jnp.float32) + params["bo"]
    return out.astype(hidden_states.dtype), p


if __name__ == "__main__":
    batch, seq, hidden, heads = 2, 8, 32, 4

    key = jax.random.PRNGKey(0)
    keys = jax.random.split(key, 10)
    wstd = hidden ** -0.5
    init = lambda k, shape, s: jax.random.normal(k, shape, jnp.float32) * s
    params = {
        "wq": init(keys[0], (hidden, hidden), wstd),
        "bq": init(keys[1], (hidden,), 0.02),
        "wk": init(keys[2], (hidden, hidden), wstd),
        "bk": init(keys[3], (hidden,), 0.02),
        "wv": init(keys[4], (hidden, hidden), wstd),
        "bv": init(keys[5], (hidden,), 0.02),
        "wo": init(keys[6], (hidden, hidden), wstd),
        "bo": init(keys[7], (hidden,), 0.02),
    }
    hidden_states = jax.random.normal(keys[8], (batch, seq, hidden), jnp.float32)

    neg = float(_NEG_INF)
    causal = jnp.where(jnp.tril(jnp.ones((seq, seq), jnp.bool_)), 0.0, neg)
    causal = jnp.broadcast_to(causal.astype(jnp.float32),
                              (batch, 1, seq, seq))

    # Path 1: causal mask, no attention probs returned.
    out, _ = partclipseg_attention(hidden_states, params, heads,
                                   causal_attention_mask=causal)
    out = jax.block_until_ready(out)
    ref_bf, _ = _reference(hidden_states, params, heads,
                           causal_attention_mask=causal,
                           matmul_dtype=jnp.bfloat16)
    ref_f32, _ = _reference(hidden_states, params, heads,
                            causal_attention_mask=causal)
    assert out.shape == (batch, seq, hidden)
    assert jnp.allclose(out, ref_bf, atol=1e-2, rtol=1e-2)
    assert jnp.allclose(out, ref_f32, atol=5e-2, rtol=5e-2)

    # Path 2: no mask, output_attentions=True.
    out2, probs2 = partclipseg_attention(hidden_states, params, heads,
                                         output_attentions=True)
    out2 = jax.block_until_ready(out2)
    ref2, refp2 = _reference(hidden_states, params, heads,
                             matmul_dtype=jnp.bfloat16)
    assert probs2.shape == (batch, heads, seq, seq)
    assert jnp.allclose(out2, ref2, atol=1e-2, rtol=1e-2)
    assert jnp.allclose(probs2, refp2, atol=1e-2, rtol=1e-2)

    # Path 3: ragged sequence (exercises padding) + HF broadcast attn mask.
    seq3 = 7
    hs3 = jax.random.normal(keys[9], (batch, seq3, hidden), jnp.float32)
    amask = jnp.zeros((batch, 1, 1, seq3), jnp.float32).at[:, :, :, 0].set(neg)
    out3, probs3 = partclipseg_attention(hs3, params, heads,
                                         attention_mask=amask,
                                         output_attentions=True)
    out3 = jax.block_until_ready(out3)
    ref3, refp3 = _reference(hs3, params, heads, attention_mask=amask,
                             matmul_dtype=jnp.bfloat16)
    assert out3.shape == (batch, seq3, hidden)
    assert probs3.shape == (batch, heads, seq3, seq3)
    assert jnp.allclose(out3, ref3, atol=1e-2, rtol=1e-2)
    assert jnp.allclose(probs3, refp3, atol=1e-2, rtol=1e-2)

    print("KERNEL_OK")
</pallas_src>

<mosaic_0001>
module attributes {stable_mosaic.version = 11 : i64} {
  func.func @_attention_kernel(%arg0: i32, %arg1: i32, %arg2: memref<1x8x32xbf16, #tpu.memory_space<vmem>>, %arg3: memref<32x96xbf16, #tpu.memory_space<vmem>>, %arg4: memref<1x96xf32, #tpu.memory_space<vmem>>, %arg5: memref<32x32xbf16, #tpu.memory_space<vmem>>, %arg6: memref<1x32xf32, #tpu.memory_space<vmem>>, %arg7: memref<1x8x8xf32, #tpu.memory_space<vmem>>, %arg8: memref<1x8x32xf32, #tpu.memory_space<vmem>>, %arg9: memref<4x8x8xbf16, #tpu.memory_space<vmem>>, %arg10: memref<4x8x8xbf16, #tpu.memory_space<vmem>>, %arg11: memref<4x8x8xbf16, #tpu.memory_space<vmem>>) attributes {dimension_semantics = [#tpu.dimension_semantics<parallel>, #tpu.dimension_semantics<arbitrary>], iteration_bounds = array<i64: 2, 1>, scalar_prefetch = 0 : i64, scratch_operands = 3 : i64, tpu.core_type = #tpu.core_type<tc>, window_params = [{transform_indices = @transform_0, window_bounds = array<i64: 1, 8, 32>}, {pipeline_mode = #tpu.pipeline_mode<synchronous>, transform_indices = @transform_1, window_bounds = array<i64: 32, 96>}, {pipeline_mode = #tpu.pipeline_mode<synchronous>, transform_indices = @transform_2, window_bounds = array<i64: 1, 96>}, {pipeline_mode = #tpu.pipeline_mode<synchronous>, transform_indices = @transform_3, window_bounds = array<i64: 32, 32>}, {pipeline_mode = #tpu.pipeline_mode<synchronous>, transform_indices = @transform_4, window_bounds = array<i64: 1, 32>}, {transform_indices = @transform_5, window_bounds = array<i64: 1, 8, 8>}, {transform_indices = @transform_6, window_bounds = array<i64: 1, 8, 32>}]} {
    %c0_i32 = arith.constant 0 : i32
    %0 = arith.cmpi eq, %arg1, %c0_i32 : i32
    %1 = arith.extui %0 : i1 to i32
    %c0_i32_0 = arith.constant 0 : i32
    %2 = arith.cmpi ne, %1, %c0_i32_0 : i32
    scf.if %2 {
      %c0_22 = arith.constant 0 : index
      %c0_23 = arith.constant 0 : index
      %c0_24 = arith.constant 0 : index
      %36 = vector.load %arg2[%c0_22, %c0_23, %c0_24] : memref<1x8x32xbf16, #tpu.memory_space<vmem>>, vector<1x8x32xbf16>
      %37 = vector.shape_cast %36 : vector<1x8x32xbf16> to vector<8x32xbf16>
      %c0_25 = arith.constant 0 : index
      %c0_26 = arith.constant 0 : index
      %38 = vector.load %arg3[%c0_25, %c0_26] : memref<32x96xbf16, #tpu.memory_space<vmem>>, vector<32x96xbf16>
      %cst_27 = arith.constant dense<0.000000e+00> : vector<8x96xf32>
      %39 = tpu.matmul %37, %38, %cst_27 {dimension_numbers = #tpu.dot_dimension_numbers<[1], [0], [0], [1], [0, 0, 1, 1], [], []>} : vector<8x32xbf16>, vector<32x96xbf16>, vector<8x96xf32> -> vector<8x96xf32>
      %c0_28 = arith.constant 0 : index
      %c0_29 = arith.constant 0 : index
      %40 = vector.load %arg4[%c0_28, %c0_29] : memref<1x96xf32, #tpu.memory_space<vmem>>, vector<1x96xf32>
      %41 = vector.broadcast %40 : vector<1x96xf32> to vector<8x96xf32>
      %42 = arith.addf %39, %41 : vector<8x96xf32>
      %43 = vector.extract_strided_slice %42 {offsets = [0, 0], sizes = [8, 32], strides = [1, 1]} : vector<8x96xf32> to vector<8x32xf32>
      %cst_30 = arith.constant 0.353553385 : f32
      %44 = vector.broadcast %cst_30 : f32 to vector<8x32xf32>
      %45 = arith.mulf %43, %44 : vector<8x32xf32>
      %46 = vector.shape_cast %45 : vector<8x32xf32> to vector<8x4x8xf32>
      %47 = tpu.transpose %46, [1, 0, 2] : vector<8x4x8xf32> -> vector<4x8x8xf32>
      %48 = arith.truncf %47 : vector<4x8x8xf32> to vector<4x8x8xbf16>
      %c0_31 = arith.constant 0 : index
      %c0_32 = arith.constant 0 : index
      %c0_33 = arith.constant 0 : index
      %49 = vector.load %arg9[%c0_31, %c0_32, %c0_33] : memref<4x8x8xbf16, #tpu.memory_space<vmem>>, vector<4x8x8xbf16>
      tpu.vector_store %arg9[%c0_31, %c0_32, %c0_33], %48 {strides = array<i32>} : memref<4x8x8xbf16, #tpu.memory_space<vmem>>, vector<4x8x8xbf16>,
      %50 = vector.extract_strided_slice %42 {offsets = [0, 32], sizes = [8, 32], strides = [1, 1]} : vector<8x96xf32> to vector<8x32xf32>
      %51 = vector.shape_cast %50 : vector<8x32xf32> to vector<8x4x8xf32>
      %52 = tpu.transpose %51, [1, 0, 2] : vector<8x4x8xf32> -> vector<4x8x8xf32>
      %53 = arith.truncf %52 : vector<4x8x8xf32> to vector<4x8x8xbf16>
      %c0_34 = arith.constant 0 : index
      %c0_35 = arith.constant 0 : index
      %c0_36 = arith.constant 0 : index
      %54 = vector.load %arg10[%c0_34, %c0_35, %c0_36] : memref<4x8x8xbf16, #tpu.memory_space<vmem>>, vector<4x8x8xbf16>
      tpu.vector_store %arg10[%c0_34, %c0_35, %c0_36], %53 {strides = array<i32>} : memref<4x8x8xbf16, #tpu.memory_space<vmem>>, vector<4x8x8xbf16>,
      %55 = vector.extract_strided_slice %42 {offsets = [0, 64], sizes = [8, 32], strides = [1, 1]} : vector<8x96xf32> to vector<8x32xf32>
      %56 = vector.shape_cast %55 : vector<8x32xf32> to vector<8x4x8xf32>
      %57 = tpu.transpose %56, [1, 0, 2] : vector<8x4x8xf32> -> vector<4x8x8xf32>
      %58 = arith.truncf %57 : vector<4x8x8xf32> to vector<4x8x8xbf16>
      %c0_37 = arith.constant 0 : index
      %c0_38 = arith.constant 0 : index
      %c0_39 = arith.constant 0 : index
      %59 = vector.load %arg11[%c0_37, %c0_38, %c0_39] : memref<4x8x8xbf16, #tpu.memory_space<vmem>>, vector<4x8x8xbf16>
      tpu.vector_store %arg11[%c0_37, %c0_38, %c0_39], %58 {strides = array<i32>} : memref<4x8x8xbf16, #tpu.memory_space<vmem>>, vector<4x8x8xbf16>,
    } else {
    }
    %c8_i32 = arith.constant 8 : i32
    %3 = arith.muli %arg1, %c8_i32 : i32
    %4 = tpu.assume_multiple %3, 8 : i32
    %c0 = arith.constant 0 : index
    %5 = arith.index_cast %4 : i32 to index
    %c0_1 = arith.constant 0 : index
    %6 = vector.load %arg9[%c0, %5, %c0_1] : memref<4x8x8xbf16, #tpu.memory_space<vmem>>, vector<4x8x8xbf16>
    %c0_2 = arith.constant 0 : index
    %c0_3 = arith.constant 0 : index
    %c0_4 = arith.constant 0 : index
    %7 = vector.load %arg10[%c0_2, %c0_3, %c0_4] : memref<4x8x8xbf16, #tpu.memory_space<vmem>>, vector<4x8x8xbf16>
    %c0_5 = arith.constant 0 : index
    %c0_6 = arith.constant 0 : index
    %c0_7 = arith.constant 0 : index
    %8 = vector.load %arg11[%c0_5, %c0_6, %c0_7] : memref<4x8x8xbf16, #tpu.memory_space<vmem>>, vector<4x8x8xbf16>
    %cst = arith.constant dense<0.000000e+00> : vector<4x8x8xf32>
    %9 = tpu.matmul %6, %7, %cst {dimension_numbers = #tpu.dot_dimension_numbers<[2], [2], [1], [1], [0, 0, 0, 1, 1, 1], [0], [0]>} : vector<4x8x8xbf16>, vector<4x8x8xbf16>, vector<4x8x8xf32> -> vector<4x8x8xf32>
    %c0_8 = arith.constant 0 : index
    %c0_9 = arith.constant 0 : index
    %c0_10 = arith.constant 0 : index
    %10 = vector.load %arg7[%c0_8, %c0_9, %c0_10] : memref<1x8x8xf32, #tpu.memory_space<vmem>>, vector<1x8x8xf32>
    %11 = vector.broadcast %10 : vector<1x8x8xf32> to vector<4x8x8xf32>
    %12 = arith.addf %9, %11 : vector<4x8x8xf32>
    %cst_11 = arith.constant dense<0xFF800000> : vector<4x8xf32>
    %13 = vector.multi_reduction <maximumf>, %12, %cst_11 [2] : vector<4x8x8xf32> to vector<4x8xf32>
    %14 = vector.shape_cast %13 : vector<4x8xf32> to vector<4x8x1xf32>
    %15 = vector.broadcast %14 : vector<4x8x1xf32> to vector<4x8x8xf32>
    %16 = arith.subf %12, %15 : vector<4x8x8xf32>
    %17 = math.exp %16 : vector<4x8x8xf32>
    %cst_12 = arith.constant dense<0.000000e+00> : vector<4x8xf32>
    %18 = vector.multi_reduction <add>, %17, %cst_12 [2] : vector<4x8x8xf32> to vector<4x8xf32>
    %19 = vector.shape_cast %18 : vector<4x8xf32> to vector<4x8x1xf32>
    %20 = tpu.reciprocal %19 {approx = true} : vector<4x8x1xf32> -> vector<4x8x1xf32>
    %21 = vector.broadcast %20 : vector<4x8x1xf32> to vector<4x8x8xf32>
    %22 = arith.mulf %17, %21 : vector<4x8x8xf32>
    %23 = arith.truncf %22 : vector<4x8x8xf32> to vector<4x8x8xbf16>
    %cst_13 = arith.constant dense<0.000000e+00> : vector<4x8x8xf32>
    %24 = tpu.matmul %23, %8, %cst_13 {dimension_numbers = #tpu.dot_dimension_numbers<[2], [1], [1], [2], [0, 0, 0, 1, 1, 2], [0], [0]>} : vector<4x8x8xbf16>, vector<4x8x8xbf16>, vector<4x8x8xf32> -> vector<4x8x8xf32>
    %25 = tpu.transpose %24, [1, 0, 2] : vector<4x8x8xf32> -> vector<8x4x8xf32>
    %26 = vector.shape_cast %25 : vector<8x4x8xf32> to vector<8x32xf32>
    %27 = arith.truncf %26 : vector<8x32xf32> to vector<8x32xbf16>
    %c0_14 = arith.constant 0 : index
    %c0_15 = arith.constant 0 : index
    %28 = vector.load %arg5[%c0_14, %c0_15] : memref<32x32xbf16, #tpu.memory_space<vmem>>, vector<32x32xbf16>
    %cst_16 = arith.constant dense<0.000000e+00> : vector<8x32xf32>
    %29 = tpu.matmul %27, %28, %cst_16 {dimension_numbers = #tpu.dot_dimension_numbers<[1], [0], [0], [1], [0, 0, 1, 1], [], []>} : vector<8x32xbf16>, vector<32x32xbf16>, vector<8x32xf32> -> vector<8x32xf32>
    %c0_17 = arith.constant 0 : index
    %c0_18 = arith.constant 0 : index
    %30 = vector.load %arg6[%c0_17, %c0_18] : memref<1x32xf32, #tpu.memory_space<vmem>>, vector<1x32xf32>
    %31 = vector.broadcast %30 : vector<1x32xf32> to vector<8x32xf32>
    %32 = arith.addf %29, %31 : vector<8x32xf32>
    %c0_19 = arith.constant 0 : index
    %c0_20 = arith.constant 0 : index
    %c0_21 = arith.constant 0 : index
    %33 = vector.load %arg8[%c0_19, %c0_20, %c0_21] : memref<1x8x32xf32, #tpu.memory_space<vmem>>, vector<1x8x32xf32>
    %34 = vector.shape_cast %33 : vector<1x8x32xf32> to vector<8x32xf32>
    %35 = vector.shape_cast %32 : vector<8x32xf32> to vector<1x8x32xf32>
    tpu.vector_store %arg8[%c0_19, %c0_20, %c0_21], %35 {strides = array<i32>} : memref<1x8x32xf32, #tpu.memory_space<vmem>>, vector<1x8x32xf32>,
    return
  }
  func.func @transform_0(%arg0: i32, %arg1: i32) -> (i32, i32, i32) {
    %c0_i32 = arith.constant 0 : i32
    %c0_i32_0 = arith.constant 0 : i32
    %c0_i32_1 = arith.constant 0 : i32
    return %arg0, %c0_i32, %c0_i32_0 : i32, i32, i32
  }
  func.func @transform_1(%arg0: i32, %arg1: i32) -> (i32, i32) {
    %c0_i32 = arith.constant 0 : i32
    %c0_i32_0 = arith.constant 0 : i32
    %c0_i32_1 = arith.constant 0 : i32
    return %c0_i32, %c0_i32_0 : i32, i32
  }
  func.func @transform_2(%arg0: i32, %arg1: i32) -> (i32, i32) {
    %c0_i32 = arith.constant 0 : i32
    %c0_i32_0 = arith.constant 0 : i32
    %c0_i32_1 = arith.constant 0 : i32
    return %c0_i32, %c0_i32_0 : i32, i32
  }
  func.func @transform_3(%arg0: i32, %arg1: i32) -> (i32, i32) {
    %c0_i32 = arith.constant 0 : i32
    %c0_i32_0 = arith.constant 0 : i32
    %c0_i32_1 = arith.constant 0 : i32
    return %c0_i32, %c0_i32_0 : i32, i32
  }
  func.func @transform_4(%arg0: i32, %arg1: i32) -> (i32, i32) {
    %c0_i32 = arith.constant 0 : i32
    %c0_i32_0 = arith.constant 0 : i32
    %c0_i32_1 = arith.constant 0 : i32
    return %c0_i32, %c0_i32_0 : i32, i32
  }
  func.func @transform_5(%arg0: i32, %arg1: i32) -> (i32, i32, i32) {
    %c0_i32 = arith.constant 0 : i32
    %c0_i32_0 = arith.constant 0 : i32
    return %arg0, %arg1, %c0_i32 : i32, i32, i32
  }
  func.func @transform_6(%arg0: i32, %arg1: i32) -> (i32, i32, i32) {
    %c0_i32 = arith.constant 0 : i32
    %c0_i32_0 = arith.constant 0 : i32
    return %arg0, %arg1, %c0_i32 : i32, i32, i32
  }
}

</mosaic_0001>

<llo_original>
// kernel: tpu_custom_call.1
$region0: #{tpu_custom_call.1}
  #allocation0 [shape = 'u32[]', space=smem, size = 0x4, offset = 0x4, fixed_abs, tag = 'smem constant byte address 0x4 - core index']
  #allocation1 [shape = 'u32[144,128]{1,0:T(1,128)}', space=vmem, size = 0x12000, scoped, tag = 'internal scratch']
  #allocation2 [shape = 'bf16[4,8,8]{2,1,0:T(8,128)(2,1)}', space=vmem, size = 0x2000, scoped, tag = 'scratch operand']
  #allocation3 [shape = 'bf16[4,8,8]{2,1,0:T(8,128)(2,1)}', space=vmem, size = 0x2000, scoped, tag = 'scratch operand']
  #allocation4 [shape = 'bf16[4,8,8]{2,1,0:T(8,128)(2,1)}', space=vmem, size = 0x2000, scoped, tag = 'scratch operand']
  %s0 = inlined_call_operand.hbm [shape: bf16[2,8,32], index: 0, kind: input, shape index: {}]
  %s1 = inlined_call_operand.hbm [shape: bf16[32,96], index: 1, kind: input, shape index: {}]
  %s2 = inlined_call_operand.vmem [shape: f32[1,96], index: 2, kind: input, shape index: {}]
  %s3 = inlined_call_operand.hbm [shape: bf16[32,32], index: 3, kind: input, shape index: {}]
  %s4 = inlined_call_operand.vmem [shape: f32[1,32], index: 4, kind: input, shape index: {}]
  %s5 = inlined_call_operand.vmem [shape: f32[2,8,8], index: 5, kind: input, shape index: {}]
  %s6 = inlined_call_operand.hbm [shape: f32[2,8,32], index: 6, kind: output, shape index: {}]
  %s7 = sld [smem:[#allocation0]]
  $region73: #{tpu_custom_call.1} parent=0
    _
  %s9 = ssub.s32 1, %s7
  %s10 = scalar_select 0, %s9, %s7
  $region1: #{tpu_custom_call.1} parent=0
    #allocation5 [shape = 'u8[4096]{0}', space=vmem, size = 0x1000, scoped, tag = 'input window, operand 0']
    #allocation6 [shape = 's32[2]{0}', space=sflag, size = 0x8, scoped, tag = 'scoped memory for tpu_custom_call.1']
    #allocation7 [shape = 's32[2]{0}', space=sflag, size = 0x8, scoped, tag = 'scoped memory for tpu_custom_call.1']
    #allocation8 [shape = 'u8[8192]{0}', space=vmem, size = 0x2000, scoped, tag = 'input window, operand 1, single buffered']
    #allocation9 [shape = 's32[1]{0}', space=sflag, size = 0x4, scoped, tag = 'scoped memory for tpu_custom_call.1']
    #allocation10 [shape = 'u8[8192]{0}', space=vmem, size = 0x2000, scoped, tag = 'input window, operand 3, single buffered']
    #allocation11 [shape = 'u8[8192]{0}', space=vmem, size = 0x2000, scoped, tag = 'output window, operand 0']
    %11 = vsyncpa [#allocation6], 0
    %s12 = scalar_lea.sflag [#allocation6], 1
    %13 = vsyncpa %s12, 0
    %14 = vsyncpa [#allocation9], 0
    %15 = vsyncpa [#allocation7], 0
    %s16 = scalar_lea.sflag [#allocation7], 1
    %17 = vsyncpa %s16, 0
    loop: start=0, step=1, limit=4
    $region2: #{tpu_custom_call.1} parent=1 // loop_pre_header
      _
    $region3: #{tpu_custom_call.1} parent=1 // loop_header
      %s19 = sphi 0, %s23
      %p20 = scmp.ge.s32.totalorder %s19, 4
      %s26 = sphi 0, %s38
      %s27 = sphi 0, %s34
      %s28 = sphi 0, %s26
      %s29 = sphi 0, %s27
      %s30 = sphi 0, %s28
      %s31 = sphi 0, %s29
      %s41 = sphi 0, %s43
      %s44 = sphi 0, %s41
      %s45 = sphi 0, %s44
      %s61 = sphi 0, %s45
      %s65 = sphi 0, %s65
      %s67 = sphi 0, %s65
      %s68 = sphi 0, %s67
      %s82 = sphi 0, %s68
      %s86 = sphi 0, %s86
      %s88 = sphi 0, %s86
      %s89 = sphi 0, %s88
      %s103 = sphi 0, %s89
      %s107 = sphi 0, %s107
      %s109 = sphi 0, %s107
      %s110 = sphi 0, %s109
      %s124 = sphi 0, %s110
      %s128 = sphi 0, %s128
      %s130 = sphi 0, %s128
      %s131 = sphi 0, %s130
      %s145 = sphi 0, %s131
      %s153 = sphi 0, %s155
      %s156 = sphi 0, %s153
      %s157 = sphi 0, %s156
      %s173 = sphi 0, %s157
      %s181 = sphi 0, %s183
      %s184 = sphi 0, %s181
      %s185 = sphi 0, %s184
      %s201 = sphi 0, %s185
    $region4: #{tpu_custom_call.1} parent=1 // loop_header_branch
      %22 = sbr.rel (%p20) target = $region8
    $region5: #{tpu_custom_call.1} parent=1 // loop_body
      %s24 = ssub.s32 %s19, 1
      %s25 = ssub.s32 %s19, 2
      %s32 = sadd.s32 1, %s27
      %p33 = scmp.ge.s32.totalorder %s32, 1
      %s34 = scalar_select %p33, 0, %s32
      %s35 = sadd.s32 1, %s26
      %s36 = scalar_select %p33, %s35, %s26
      %p37 = scmp.ge.s32.totalorder %s36, 2
      %s38 = scalar_select %p37, 0, %s36
      %s39 = ssub.s32 %s26, %s38
      %p40 = scmp.eq.s32.totalorder %s39, 0
      %s42 = sadd.s32 %s41, 1
      %s43 = scalar_select %p40, %s41, %s42
      %p46 = pneg %p40
      %p47 = scmp.eq.s32.totalorder %s19, 1
      %p48 = por %p46, %p47
      %p49 = scmp.ne.s32.totalorder %s41, %s44
      %p50 = scmp.eq.s32.totalorder %s19, 0
      %p51 = por %p49, %p50
      %p52 = scmp.ne.s32.totalorder %s41, %s44
      %p53 = scmp.eq.s32.totalorder %s24, 1
      %p54 = por %p52, %p53
      %p55 = scmp.ne.s32.totalorder %s44, %s45
      %p56 = scmp.eq.s32.totalorder %s24, 0
      %p57 = por %p55, %p56
      %p58 = scmp.ne.s32.totalorder %s44, %s45
      %p59 = scmp.eq.s32.totalorder %s25, 1
      %p60 = por %p58, %p59
      %p62 = scmp.ne.s32.totalorder %s45, %s61
      %p63 = scmp.eq.s32.totalorder %s25, 0
      %p64 = por %p62, %p63
      %s66 = sadd.s32 %s65, 1
      %p69 = scmp.eq.s32.totalorder %s19, 1
      %p70 = scmp.ne.s32.totalorder %s65, %s67
      %p71 = scmp.eq.s32.totalorder %s19, 0
      %p72 = por %p70, %p71
      %p73 = scmp.ne.s32.totalorder %s65, %s67
      %p74 = scmp.eq.s32.totalorder %s24, 1
      %p75 = por %p73, %p74
      %p76 = scmp.ne.s32.totalorder %s67, %s68
      %p77 = scmp.eq.s32.totalorder %s24, 0
      %p78 = por %p76, %p77
      %p79 = scmp.ne.s32.totalorder %s67, %s68
      %p80 = scmp.eq.s32.totalorder %s25, 1
      %p81 = por %p79, %p80
      %p83 = scmp.ne.s32.totalorder %s68, %s82
      %p84 = scmp.eq.s32.totalorder %s25, 0
      %p85 = por %p83, %p84
      %s87 = sadd.s32 %s86, 1
      %p90 = scmp.eq.s32.totalorder %s19, 1
      %p91 = scmp.ne.s32.totalorder %s86, %s88
      %p92 = scmp.eq.s32.totalorder %s19, 0
      %p93 = por %p91, %p92
      %p94 = scmp.ne.s32.totalorder %s86, %s88
      %p95 = scmp.eq.s32.totalorder %s24, 1
      %p96 = por %p94, %p95
      %p97 = scmp.ne.s32.totalorder %s88, %s89
      %p98 = scmp.eq.s32.totalorder %s24, 0
      %p99 = por %p97, %p98
      %p100 = scmp.ne.s32.totalorder %s88, %s89
      %p101 = scmp.eq.s32.totalorder %s25, 1
      %p102 = por %p100, %p101
      %p104 = scmp.ne.s32.totalorder %s89, %s103
      %p105 = scmp.eq.s32.totalorder %s25, 0
      %p106 = por %p104, %p105
      %s108 = sadd.s32 %s107, 1
      %p111 = scmp.eq.s32.totalorder %s19, 1
      %p112 = scmp.ne.s32.totalorder %s107, %s109
      %p113 = scmp.eq.s32.totalorder %s19, 0
      %p114 = por %p112, %p113
      %p115 = scmp.ne.s32.totalorder %s107, %s109
      %p116 = scmp.eq.s32.totalorder %s24, 1
      %p117 = por %p115, %p116
      %p118 = scmp.ne.s32.totalorder %s109, %s110
      %p119 = scmp.eq.s32.totalorder %s24, 0
      %p120 = por %p118, %p119
      %p121 = scmp.ne.s32.totalorder %s109, %s110
      %p122 = scmp.eq.s32.totalorder %s25, 1
      %p123 = por %p121, %p122
      %p125 = scmp.ne.s32.totalorder %s110, %s124
      %p126 = scmp.eq.s32.totalorder %s25, 0
      %p127 = por %p125, %p126
      %s129 = sadd.s32 %s128, 1
      %p132 = scmp.eq.s32.totalorder %s19, 1
      %p133 = scmp.ne.s32.totalorder %s128, %s130
      %p134 = scmp.eq.s32.totalorder %s19, 0
      %p135 = por %p133, %p134
      %p136 = scmp.ne.s32.totalorder %s128, %s130
      %p137 = scmp.eq.s32.totalorder %s24, 1
      %p138 = por %p136, %p137
      %p139 = scmp.ne.s32.totalorder %s130, %s131
      %p140 = scmp.eq.s32.totalorder %s24, 0
      %p141 = por %p139, %p140
      %p142 = scmp.ne.s32.totalorder %s130, %s131
      %p143 = scmp.eq.s32.totalorder %s25, 1
      %p144 = por %p142, %p143
      %p146 = scmp.ne.s32.totalorder %s131, %s145
      %p147 = scmp.eq.s32.totalorder %s25, 0
      %p148 = por %p146, %p147
      %s149 = ssub.s32 %s26, %s38
      %s150 = ssub.s32 %s27, %s34
      %s151 = sor.u32 %s149, %s150
      %p152 = scmp.eq.s32.totalorder %s151, 0
      %s154 = sadd.s32 %s153, 1
      %s155 = scalar_select %p152, %s153, %s154
      %p158 = pneg %p152
      %p159 = scmp.eq.s32.totalorder %s19, 1
      %p160 = por %p158, %p159
      %p161 = scmp.ne.s32.totalorder %s153, %s156
      %p162 = scmp.eq.s32.totalorder %s19, 0
      %p163 = por %p161, %p162
      %p164 = scmp.ne.s32.totalorder %s153, %s156
      %p165 = scmp.eq.s32.totalorder %s24, 1
      %p166 = por %p164, %p165
      %p167 = scmp.ne.s32.totalorder %s156, %s157
      %p168 = scmp.eq.s32.totalorder %s24, 0
      %p169 = por %p167, %p168
      %p170 = scmp.ne.s32.totalorder %s156, %s157
      %p171 = scmp.eq.s32.totalorder %s25, 1
      %p172 = por %p170, %p171
      %p174 = scmp.ne.s32.totalorder %s157, %s173
      %p175 = scmp.eq.s32.totalorder %s25, 0
      %p176 = por %p174, %p175
      %s177 = ssub.s32 %s26, %s38
      %s178 = ssub.s32 %s27, %s34
      %s179 = sor.u32 %s177, %s178
      %p180 = scmp.eq.s32.totalorder %s179, 0
      %s182 = sadd.s32 %s181, 1
      %s183 = scalar_select %p180, %s181, %s182
      %p186 = pneg %p180
      %p187 = scmp.eq.s32.totalorder %s19, 1
      %p188 = por %p186, %p187
      %p189 = scmp.ne.s32.totalorder %s181, %s184
      %p190 = scmp.eq.s32.totalorder %s19, 0
      %p191 = por %p189, %p190
      %p192 = scmp.ne.s32.totalorder %s181, %s184
      %p193 = scmp.eq.s32.totalorder %s24, 1
      %p194 = por %p192, %p193
      %p195 = scmp.ne.s32.totalorder %s184, %s185
      %p196 = scmp.eq.s32.totalorder %s24, 0
      %p197 = por %p195, %p196
      %p198 = scmp.ne.s32.totalorder %s184, %s185
      %p199 = scmp.eq.s32.totalorder %s25, 1
      %p200 = por %p198, %p199
      %p202 = scmp.ne.s32.totalorder %s185, %s201
      %p203 = scmp.eq.s32.totalorder %s25, 0
      %p204 = por %p202, %p203
      %p205 = scmp.le.s32.totalorder 1, %s19
      %p206 = scmp.lt.s32.totalorder %s19, 3
      %p207 = pnand %p205, %p206
      %p208 = pneg %p207
      // Predicated region
      $region9: #{tpu_custom_call.1} parent=5 // pred_check
        _
      $region10: #{tpu_custom_call.1} parent=5 // pred_check_branch
        %210 = sbr.rel (%p207) target = $region12
      $region11: #{tpu_custom_call.1} parent=5 // pred_region
        %s211 = ssub.s32 %s19, 1
        // Predicated region
        $region13: #{tpu_custom_call.1} parent=11 // pred_check
          %p212 = pneg %p78
        $region14: #{tpu_custom_call.1} parent=11 // pred_check_branch
          %214 = sbr.rel (%p212) target = $region16
        $region15: #{tpu_custom_call.1} parent=11 // pred_region
          %s216 = ssub.s32 256, 256
          %217 = vsyncadd [#allocation9], %s216
          %s218 = sshll.u32 [#allocation8], 4
          %s219 = int_to_ptr.vmem [resolvable:$true] %s218
          %224 = dma.hbm_to_vmem [thread:$0]  %s1, 256, %s219, [#allocation9], 64, 64, 4
        $region16: #{tpu_custom_call.1} parent=11 // pred_fallthru
          _
        // Predicated region
        $region17: #{tpu_custom_call.1} parent=11 // pred_check
          %p225 = pneg %p99
        $region18: #{tpu_custom_call.1} parent=11 // pred_check_branch
          %227 = sbr.rel (%p225) target = $region20
        $region19: #{tpu_custom_call.1} parent=11 // pred_region
          _
        $region20: #{tpu_custom_call.1} parent=11 // pred_fallthru
          _
        // Predicated region
        $region21: #{tpu_custom_call.1} parent=11 // pred_check
          %p228 = pneg %p120
        $region22: #{tpu_custom_call.1} parent=11 // pred_check_branch
          %230 = sbr.rel (%p228) target = $region24
        $region23: #{tpu_custom_call.1} parent=11 // pred_region
          %s232 = ssub.s32 256, 256
          %233 = vsyncadd [#allocation9], %s232
          %s234 = sshll.u32 [#allocation10], 4
          %s235 = int_to_ptr.vmem [resolvable:$true] %s234
          %240 = dma.hbm_to_vmem [thread:$0]  %s3, 256, %s235, [#allocation9], 64, 64, 4
        $region24: #{tpu_custom_call.1} parent=11 // pred_fallthru
          _
        // Predicated region
        $region25: #{tpu_custom_call.1} parent=11 // pred_check
          %p241 = pneg %p141
        $region26: #{tpu_custom_call.1} parent=11 // pred_check_branch
          %243 = sbr.rel (%p241) target = $region28
        $region27: #{tpu_custom_call.1} parent=11 // pred_region
          _
        $region28: #{tpu_custom_call.1} parent=11 // pred_fallthru
          _
      $region12: #{tpu_custom_call.1} parent=5 // pred_fallthru
        _
      %p244 = scmp.lt.s32.totalorder %s19, 2
      // Predicated region
      $region29: #{tpu_custom_call.1} parent=5 // pred_check
        %p245 = pneg %p244
      $region30: #{tpu_custom_call.1} parent=5 // pred_check_branch
        %247 = sbr.rel (%p245) target = $region32
      $region31: #{tpu_custom_call.1} parent=5 // pred_region
        // Predicated region
        $region33: #{tpu_custom_call.1} parent=31 // pred_check
          %p248 = pneg %p51
        $region34: #{tpu_custom_call.1} parent=31 // pred_check_branch
          %250 = sbr.rel (%p248) target = $region36
        $region35: #{tpu_custom_call.1} parent=31 // pred_region
          %s251 = sand.u32 %s41, 1
          %s252 = scalar_lea.sflag [#allocation6], %s251
          %s253 = sand.u32 %s41, 1
          %s254 = smul.addr %s253, 4
          %s255 = scalar_lea.vmem [#allocation5], %s254
          %s257 = ssub.s32 64, 64
          %258 = vsyncadd %s252, %s257
          %s259 = smul.addr %s26, 64
          %s260 = scalar_lea.hbm %s0, %s259
          %s262 = sshll.u32 %s255, 4
          %s263 = int_to_ptr.vmem [resolvable:$true] %s262
          %265 = dma.hbm_to_vmem [thread:$0]  %s260, 64, %s263, %s252
        $region36: #{tpu_custom_call.1} parent=31 // pred_fallthru
          _
        // Predicated region
        $region37: #{tpu_custom_call.1} parent=31 // pred_check
          %p266 = pneg %p163
        $region38: #{tpu_custom_call.1} parent=31 // pred_check_branch
          %268 = sbr.rel (%p266) target = $region40
        $region39: #{tpu_custom_call.1} parent=31 // pred_region
          %p269 = scmp.lt.s32.totalorder %s26, 1
          %s270 = scalar_select %p269, %s26, 1
          %p271 = scmp.lt.s32.totalorder %s27, 0
          %s272 = scalar_select %p271, %s27, 0
          %s273 = sadd.s32 %s272, %s270
          %s274 = smul.addr %s273, 8
          %s275 = scalar_lea.vmem %s5, %s274
        $region40: #{tpu_custom_call.1} parent=31 // pred_fallthru
          _
      $region32: #{tpu_custom_call.1} parent=5 // pred_fallthru
        _
      %p276 = scmp.le.s32.totalorder 1, %s19
      %p277 = scmp.lt.s32.totalorder %s19, 3
      %p278 = pnand %p276, %p277
      %p279 = pneg %p278
      // Predicated region
      $region41: #{tpu_custom_call.1} parent=5 // pred_check
        _
      $region42: #{tpu_custom_call.1} parent=5 // pred_check_branch
        %281 = sbr.rel (%p278) target = $region44
      $region43: #{tpu_custom_call.1} parent=5 // pred_region
        %s282 = ssub.s32 %s19, 1
        %s283 = sand.u32 %s44, 1
        %s284 = scalar_lea.sflag [#allocation6], %s283
        %s285 = sand.u32 %s44, 1
        %s286 = smul.addr %s285, 4
        %s287 = scalar_lea.vmem [#allocation5], %s286
        // Predicated region
        $region45: #{tpu_custom_call.1} parent=43 // pred_check
          %p288 = pneg %p57
        $region46: #{tpu_custom_call.1} parent=43 // pred_check_branch
          %290 = sbr.rel (%p288) target = $region48
        $region47: #{tpu_custom_call.1} parent=43 // pred_region
          %291 = dma.done %s284, 64
        $region48: #{tpu_custom_call.1} parent=43 // pred_fallthru
          _
        // Predicated region
        $region49: #{tpu_custom_call.1} parent=43 // pred_check
          %p292 = pneg %p78
        $region50: #{tpu_custom_call.1} parent=43 // pred_check_branch
          %294 = sbr.rel (%p292) target = $region52
        $region51: #{tpu_custom_call.1} parent=43 // pred_region
          %295 = dma.done [#allocation9], 256
        $region52: #{tpu_custom_call.1} parent=43 // pred_fallthru
          _
        // Predicated region
        $region53: #{tpu_custom_call.1} parent=43 // pred_check
          %p296 = pneg %p120
        $region54: #{tpu_custom_call.1} parent=43 // pred_check_branch
          %298 = sbr.rel (%p296) target = $region56
        $region55: #{tpu_custom_call.1} parent=43 // pred_region
          %299 = dma.done [#allocation9], 256
        $region56: #{tpu_custom_call.1} parent=43 // pred_fallthru
          _
        %s300 = sand.u32 %s44, 1
        %s301 = scalar_lea.sflag [#allocation6], %s300
        %s302 = sand.u32 %s44, 1
        %s303 = smul.addr %s302, 4
        %s304 = scalar_lea.vmem [#allocation5], %s303
        %p305 = pneg %p57
        %p306 = pneg %p54
        %p307 = pneg %p78
        %p308 = pneg %p75
        %p309 = pneg %p99
        %p310 = pneg %p96
        %p311 = pneg %p120
        %p312 = pneg %p117
        %p313 = pneg %p141
        %p314 = pneg %p138
        %p315 = scmp.lt.s32.totalorder %s28, 1
        %s316 = scalar_select %p315, %s28, 1
        %p317 = scmp.lt.s32.totalorder %s29, 0
        %s318 = scalar_select %p317, %s29, 0
        %s319 = sadd.s32 %s318, %s316
        %s320 = smul.addr %s319, 8
        %s321 = scalar_lea.vmem %s5, %s320
        %p322 = pneg %p169
        %p323 = pneg %p166
        %p324 = pneg %p197
        %p325 = pneg %p194
        %s326 = sand.u32 %s184, 1
        %s327 = scalar_lea.sflag [#allocation7], %s326
        %s328 = sand.u32 %s184, 1
        %s329 = smul.addr %s328, 8
        %s330 = scalar_lea.vmem [#allocation11], %s329
        %p331 = scmp.lt.s32.totalorder %s28, 1
        %s332 = scalar_select %p331, %s28, 1
        %p333 = scmp.lt.s32.totalorder %s29, 0
        %s334 = scalar_select %p333, %s29, 0
        %s335 = sadd.s32 %s334, %s332
        %s336 = smul.addr %s335, 8
        %s337 = scalar_lea.vmem %s5, %s336
        %p339 = scmp.eq.s32.totalorder %s29, 0
        // Predicated region
        $region57: #{tpu_custom_call.1} parent=43 // pred_check
          %p340 = pneg %p339
        $region58: #{tpu_custom_call.1} parent=43 // pred_check_branch
          %342 = sbr.rel (%p340) target = $region60
        $region59: #{tpu_custom_call.1} parent=43 // pred_region
          %v343 = vld [vmem:[%s287] sm:$0xf]
          %v344 = vld [vmem:[#allocation8] sm:$0xf]
          %v345 = vld [vmem:[#allocation8 + $0x4] sm:$0xf]
          %v346 = vld [vmem:[#allocation8 + $0x8] sm:$0xf]
          %v347 = vld [vmem:[#allocation8 + $0xc] sm:$0xf]
          %v348 = vld [vmem:[%s2] sm:$0x1]
          %v350 = vlaneseq
          %v351 = vshrl.u32 %v350, 7
          %v352 = vsub.s32 0, %v351
          %v353 = vrot.slane %v348, %v352
          %v359 = vunpack.c.l.b16 %v344
          %v360 = vunpack.c.l.b16 %v345
          %v361 = vunpack.c.l.b16 %v346
          %v362 = vunpack.c.l.b16 %v347
          %v363 = vpack.c.b16 %v360, %v359
          %v364 = vpack.c.b16 %v362, %v361
          %vm367 = vcmask 261120
          %v369 = vsel %vm367, %v343, 0
          %371 = vmatprep.subr.bf16.mxu0 0
          %372 = vmatpush1.bf16.msra.mxu0 %v363
          %373 = vmatprep.subr.bf16.mxu0 0
          %374 = vmatpush1.bf16.msra.mxu0 %v364
          %375 = vmatprep.subr.bf16.mxu0 0
          %376 = vmatpush1.bf16.msra.mxu0 0
          %377 = vmatprep.subr.bf16.mxu0 0
          %378 = vmatpush1.bf16.msra.mxu0 0
          %379 = vmatprep.subr.bf16.mxu0 0
          %380 = vmatpush1.bf16.msra.mxu0 0
          %381 = vmatprep.subr.bf16.mxu0 0
          %382 = vmatpush1.bf16.msra.mxu0 0
          %383 = vmatprep.subr.bf16.mxu0 0
          %384 = vmatpush1.bf16.msra.mxu0 0
          %385 = vmatprep.subr.bf16.mxu0 0
          %386 = vmatpush1.bf16.msra.mxu0 0
          %387 = vmatprep.subr.bf16.mxu0 0
          %388 = vmatpush1.bf16.msra.mxu0 0
          %389 = vmatprep.subr.bf16.mxu0 0
          %390 = vmatpush1.bf16.msra.mxu0 0
          %391 = vmatprep.subr.bf16.mxu0 0
          %392 = vmatpush1.bf16.msra.mxu0 0
          %393 = vmatprep.subr.bf16.mxu0 0
          %394 = vmatpush1.bf16.msra.mxu0 0
          %395 = vmatprep.subr.bf16.mxu0 0
          %396 = vmatpush1.bf16.msra.mxu0 0
          %397 = vmatprep.subr.bf16.mxu0 0
          %398 = vmatpush1.bf16.msra.mxu0 0
          %399 = vmatprep.subr.bf16.mxu0 0
          %400 = vmatpush1.bf16.msra.mxu0 0
          %401 = vmatprep.subr.bf16.mxu0 0
          %402 = vmatpush1.bf16.msra.mxu0 0
          %403 = vmatprep.mubr.bf16.mxu0 0
          %404 = vmatmul.mubr.bf16.gmra.mrb[0].mxu0 %v369
          %v405 = vpop.f32.mrb[0].mxu0
          %v406 = vadd.f32 %v353, %v405
          %v407 = vpop.f32.mrb[0].mxu0
          %v408 = vpop.f32.mrb[0].mxu0
          %v409 = vpop.f32.mrb[0].mxu0
          %410 = vdwg.mxu0
          %v411 = vmul.f32 %v406, 0.35355338
          %413 = vrot.lane.b32.xlu0 %v411, 120
          %v414 = vpop.permute.xlu0 %413
          %416 = vrot.lane.b32.xlu0 %v411, 112
          %v417 = vpop.permute.xlu0 %416
          %419 = vrot.lane.b32.xlu0 %v411, 104
          %v420 = vpop.permute.xlu0 %419
          %v422 = vcombine.low %v411, %v417
          %v423 = vcombine.high %v411, %v417
          %v425 = vunpack.c.l.s4 1983009808
          %v426 = vunpack.c.0.s8 %v425
          %v427 = vlaneseq
          %v428 = vshrl.u32 %v427, 7
          %v429 = vsub.s32 %v426, %v428
          %v430 = vrot.slane %v422, %v429
          %v432 = vunpack.c.l.s4 1983009808
          %v433 = vunpack.c.0.s8 %v432
          %v434 = vlaneseq
          %v435 = vshrl.u32 %v434, 7
          %v436 = vsub.s32 %v433, %v435
          %v437 = vrot.slane %v423, %v436
          %v438 = vcombine.low %v414, %v420
          %v439 = vcombine.high %v414, %v420
          %v441 = vunpack.c.l.s4 1983009808
          %v442 = vunpack.c.0.s8 %v441
          %v443 = vlaneseq
          %v444 = vshrl.u32 %v443, 7
          %v445 = vsub.s32 %v442, %v444
          %v446 = vrot.slane %v438, %v445
          %v448 = vunpack.c.l.s4 1983009808
          %v449 = vunpack.c.0.s8 %v448
          %v450 = vlaneseq
          %v451 = vshrl.u32 %v450, 7
          %v452 = vsub.s32 %v449, %v451
          %v453 = vrot.slane %v439, %v452
          %v454 = vcombine.low %v430, %v446
          %v455 = vcombine.high %v430, %v446
          %v457 = vunpack.c.l.s4 1934713408
          %v458 = vunpack.c.0.s8 %v457
          %v459 = vlaneseq
          %v460 = vshrl.u32 %v459, 7
          %v461 = vsub.s32 %v458, %v460
          %v462 = vrot.slane %v454, %v461
          %v464 = vunpack.c.l.s4 1934713408
          %v465 = vunpack.c.0.s8 %v464
          %v466 = vlaneseq
          %v467 = vshrl.u32 %v466, 7
          %v468 = vsub.s32 %v465, %v467
          %v469 = vrot.slane %v455, %v468
          %v470 = vcombine.low %v437, %v453
          %v471 = vcombine.high %v437, %v453
          %v473 = vunpack.c.l.s4 1934713408
          %v474 = vunpack.c.0.s8 %v473
          %v475 = vlaneseq
          %v476 = vshrl.u32 %v475, 7
          %v477 = vsub.s32 %v474, %v476
          %v478 = vrot.slane %v470, %v477
          %v480 = vunpack.c.l.s4 1934713408
          %v481 = vunpack.c.0.s8 %v480
          %v482 = vlaneseq
          %v483 = vshrl.u32 %v482, 7
          %v484 = vsub.s32 %v481, %v483
          %v485 = vrot.slane %v471, %v484
          %v486 = vcombine.high %v462, 0.0
          %v487 = vcombine.high %v469, 0.0
          %v488 = vcombine.high %v478, 0.0
          %v489 = vcombine.high %v485, 0.0
          %v490 = vcombine.low %v462, %v469
          %v492 = vunpack.c.l.s4 1983009808
          %v493 = vunpack.c.0.s8 %v492
          %v494 = vlaneseq
          %v495 = vshrl.u32 %v494, 7
          %v496 = vsub.s32 %v493, %v495
          %v497 = vrot.slane %v490, %v496
          %v498 = vcombine.low %v486, %v487
          %v500 = vunpack.c.l.s4 1983009808
          %v501 = vunpack.c.0.s8 %v500
          %v502 = vlaneseq
          %v503 = vshrl.u32 %v502, 7
          %v504 = vsub.s32 %v501, %v503
          %v505 = vrot.slane %v498, %v504
          %v506 = vcombine.low %v478, %v485
          %v508 = vunpack.c.l.s4 1983009808
          %v509 = vunpack.c.0.s8 %v508
          %v510 = vlaneseq
          %v511 = vshrl.u32 %v510, 7
          %v512 = vsub.s32 %v509, %v511
          %v513 = vrot.slane %v506, %v512
          %v514 = vcombine.low %v488, %v489
          %v516 = vunpack.c.l.s4 1983009808
          %v517 = vunpack.c.0.s8 %v516
          %v518 = vlaneseq
          %v519 = vshrl.u32 %v518, 7
          %v520 = vsub.s32 %v517, %v519
          %v521 = vrot.slane %v514, %v520
          %v522 = vcombine.low %v497, %v505
          %v523 = vcombine.high %v497, %v505
          %v525 = vunpack.c.l.s4 1934713408
          %v526 = vunpack.c.0.s8 %v525
          %v527 = vlaneseq
          %v528 = vshrl.u32 %v527, 7
          %v529 = vsub.s32 %v526, %v528
          %v530 = vrot.slane %v522, %v529
          %v532 = vunpack.c.l.s4 1934713408
          %v533 = vunpack.c.0.s8 %v532
          %v534 = vlaneseq
          %v535 = vshrl.u32 %v534, 7
          %v536 = vsub.s32 %v533, %v535
          %v537 = vrot.slane %v523, %v536
          %v538 = vcombine.low %v513, %v521
          %v539 = vcombine.high %v513, %v521
          %v541 = vunpack.c.l.s4 1934713408
          %v542 = vunpack.c.0.s8 %v541
          %v543 = vlaneseq
          %v544 = vshrl.u32 %v543, 7
          %v545 = vsub.s32 %v542, %v544
          %v546 = vrot.slane %v538, %v545
          %v548 = vunpack.c.l.s4 1934713408
          %v549 = vunpack.c.0.s8 %v548
          %v550 = vlaneseq
          %v551 = vshrl.u32 %v550, 7
          %v552 = vsub.s32 %v549, %v551
          %v553 = vrot.slane %v539, %v552
          %v554 = vcombine.low %v530, %v546
          %v555 = vcombine.high %v530, %v546
          %v556 = vcombine.low %v537, %v553
          %v557 = vcombine.high %v537, %v553
          %v558 = vpack.c.bf16 %v554, %v554
          %v559 = vpack.c.bf16 %v555, %v555
          %v560 = vpack.c.bf16 %v556, %v556
          %v561 = vpack.c.bf16 %v557, %v557
          %vm562 = vcmask 60416
          %563 = vst.msk [vmem:[#allocation2] sm:$0xf] %vm562, %v558
          %564 = vst.msk [vmem:[#allocation2 + $0x4] sm:$0xf] %vm562, %v559
          %565 = vst.msk [vmem:[#allocation2 + $0x8] sm:$0xf] %vm562, %v560
          %566 = vst.msk [vmem:[#allocation2 + $0xc] sm:$0xf] %vm562, %v561
          %568 = vrot.lane.b32.xlu0 %v406, 120
          %v569 = vpop.permute.xlu0 %568
          %570 = vrot.lane.b32.xlu0 %v406, 112
          %v571 = vpop.permute.xlu0 %570
          %572 = vrot.lane.b32.xlu0 %v406, 104
          %v573 = vpop.permute.xlu0 %572
          %574 = vrot.lane.b32.xlu0 %v406, 96
          %v575 = vpop.permute.xlu0 %574
          %576 = vrot.lane.b32.xlu0 %v569, 96
          %v577 = vpop.permute.xlu0 %576
          %578 = vrot.lane.b32.xlu0 %v571, 96
          %v579 = vpop.permute.xlu0 %578
          %580 = vrot.lane.b32.xlu0 %v573, 96
          %v581 = vpop.permute.xlu0 %580
          %v586 = vcombine.low %v575, %v579
          %v587 = vcombine.high %v575, %v579
          %v589 = vunpack.c.l.s4 1983009808
          %v590 = vunpack.c.0.s8 %v589
          %v591 = vlaneseq
          %v592 = vshrl.u32 %v591, 7
          %v593 = vsub.s32 %v590, %v592
          %v594 = vrot.slane %v586, %v593
          %v596 = vunpack.c.l.s4 1983009808
          %v597 = vunpack.c.0.s8 %v596
          %v598 = vlaneseq
          %v599 = vshrl.u32 %v598, 7
          %v600 = vsub.s32 %v597, %v599
          %v601 = vrot.slane %v587, %v600
          %v602 = vcombine.low %v577, %v581
          %v603 = vcombine.high %v577, %v581
          %v605 = vunpack.c.l.s4 1983009808
          %v606 = vunpack.c.0.s8 %v605
          %v607 = vlaneseq
          %v608 = vshrl.u32 %v607, 7
          %v609 = vsub.s32 %v606, %v608
          %v610 = vrot.slane %v602, %v609
          %v612 = vunpack.c.l.s4 1983009808
          %v613 = vunpack.c.0.s8 %v612
          %v614 = vlaneseq
          %v615 = vshrl.u32 %v614, 7
          %v616 = vsub.s32 %v613, %v615
          %v617 = vrot.slane %v603, %v616
          %v618 = vcombine.low %v594, %v610
          %v619 = vcombine.high %v594, %v610
          %v621 = vunpack.c.l.s4 1934713408
          %v622 = vunpack.c.0.s8 %v621
          %v623 = vlaneseq
          %v624 = vshrl.u32 %v623, 7
          %v625 = vsub.s32 %v622, %v624
          %v626 = vrot.slane %v618, %v625
          %v628 = vunpack.c.l.s4 1934713408
          %v629 = vunpack.c.0.s8 %v628
          %v630 = vlaneseq
          %v631 = vshrl.u32 %v630, 7
          %v632 = vsub.s32 %v629, %v631
          %v633 = vrot.slane %v619, %v632
          %v634 = vcombine.low %v601, %v617
          %v635 = vcombine.high %v601, %v617
          %v637 = vunpack.c.l.s4 1934713408
          %v638 = vunpack.c.0.s8 %v637
          %v639 = vlaneseq
          %v640 = vshrl.u32 %v639, 7
          %v641 = vsub.s32 %v638, %v640
          %v642 = vrot.slane %v634, %v641
          %v644 = vunpack.c.l.s4 1934713408
          %v645 = vunpack.c.0.s8 %v644
          %v646 = vlaneseq
          %v647 = vshrl.u32 %v646, 7
          %v648 = vsub.s32 %v645, %v647
          %v649 = vrot.slane %v635, %v648
          %v650 = vcombine.high %v626, 0.0
          %v651 = vcombine.high %v633, 0.0
          %v652 = vcombine.high %v642, 0.0
          %v653 = vcombine.high %v649, 0.0
          %v654 = vcombine.low %v626, %v633
          %v656 = vunpack.c.l.s4 1983009808
          %v657 = vunpack.c.0.s8 %v656
          %v658 = vlaneseq
          %v659 = vshrl.u32 %v658, 7
          %v660 = vsub.s32 %v657, %v659
          %v661 = vrot.slane %v654, %v660
          %v662 = vcombine.low %v650, %v651
          %v664 = vunpack.c.l.s4 1983009808
          %v665 = vunpack.c.0.s8 %v664
          %v666 = vlaneseq
          %v667 = vshrl.u32 %v666, 7
          %v668 = vsub.s32 %v665, %v667
          %v669 = vrot.slane %v662, %v668
          %v670 = vcombine.low %v642, %v649
          %v672 = vunpack.c.l.s4 1983009808
          %v673 = vunpack.c.0.s8 %v672
          %v674 = vlaneseq
          %v675 = vshrl.u32 %v674, 7
          %v676 = vsub.s32 %v673, %v675
          %v677 = vrot.slane %v670, %v676
          %v678 = vcombine.low %v652, %v653
          %v680 = vunpack.c.l.s4 1983009808
          %v681 = vunpack.c.0.s8 %v680
          %v682 = vlaneseq
          %v683 = vshrl.u32 %v682, 7
          %v684 = vsub.s32 %v681, %v683
          %v685 = vrot.slane %v678, %v684
          %v686 = vcombine.low %v661, %v669
          %v687 = vcombine.high %v661, %v669
          %v689 = vunpack.c.l.s4 1934713408
          %v690 = vunpack.c.0.s8 %v689
          %v691 = vlaneseq
          %v692 = vshrl.u32 %v691, 7
          %v693 = vsub.s32 %v690, %v692
          %v694 = vrot.slane %v686, %v693
          %v696 = vunpack.c.l.s4 1934713408
          %v697 = vunpack.c.0.s8 %v696
          %v698 = vlaneseq
          %v699 = vshrl.u32 %v698, 7
          %v700 = vsub.s32 %v697, %v699
          %v701 = vrot.slane %v687, %v700
          %v702 = vcombine.low %v677, %v685
          %v703 = vcombine.high %v677, %v685
          %v705 = vunpack.c.l.s4 1934713408
          %v706 = vunpack.c.0.s8 %v705
          %v707 = vlaneseq
          %v708 = vshrl.u32 %v707, 7
          %v709 = vsub.s32 %v706, %v708
          %v710 = vrot.slane %v702, %v709
          %v712 = vunpack.c.l.s4 1934713408
          %v713 = vunpack.c.0.s8 %v712
          %v714 = vlaneseq
          %v715 = vshrl.u32 %v714, 7
          %v716 = vsub.s32 %v713, %v715
          %v717 = vrot.slane %v703, %v716
          %v718 = vcombine.low %v694, %v710
          %v719 = vcombine.high %v694, %v710
          %v720 = vcombine.low %v701, %v717
          %v721 = vcombine.high %v701, %v717
          %v722 = vpack.c.bf16 %v718, %v718
          %v723 = vpack.c.bf16 %v719, %v719
          %v724 = vpack.c.bf16 %v720, %v720
          %v725 = vpack.c.bf16 %v721, %v721
          %726 = vst.msk [vmem:[#allocation3] sm:$0xf] %vm562, %v722
          %727 = vst.msk [vmem:[#allocation3 + $0x4] sm:$0xf] %vm562, %v723
          %728 = vst.msk [vmem:[#allocation3 + $0x8] sm:$0xf] %vm562, %v724
          %729 = vst.msk [vmem:[#allocation3 + $0xc] sm:$0xf] %vm562, %v725
          %730 = vrot.lane.b32.xlu0 %v406, 64
          %v731 = vpop.permute.xlu0 %730
          %732 = vrot.lane.b32.xlu0 %v569, 64
          %v733 = vpop.permute.xlu0 %732
          %734 = vrot.lane.b32.xlu0 %v571, 64
          %v735 = vpop.permute.xlu0 %734
          %736 = vrot.lane.b32.xlu0 %v573, 64
          %v737 = vpop.permute.xlu0 %736
          %v742 = vcombine.low %v731, %v735
          %v743 = vcombine.high %v731, %v735
          %v745 = vunpack.c.l.s4 1983009808
          %v746 = vunpack.c.0.s8 %v745
          %v747 = vlaneseq
          %v748 = vshrl.u32 %v747, 7
          %v749 = vsub.s32 %v746, %v748
          %v750 = vrot.slane %v742, %v749
          %v752 = vunpack.c.l.s4 1983009808
          %v753 = vunpack.c.0.s8 %v752
          %v754 = vlaneseq
          %v755 = vshrl.u32 %v754, 7
          %v756 = vsub.s32 %v753, %v755
          %v757 = vrot.slane %v743, %v756
          %v758 = vcombine.low %v733, %v737
          %v759 = vcombine.high %v733, %v737
          %v761 = vunpack.c.l.s4 1983009808
          %v762 = vunpack.c.0.s8 %v761
          %v763 = vlaneseq
          %v764 = vshrl.u32 %v763, 7
          %v765 = vsub.s32 %v762, %v764
          %v766 = vrot.slane %v758, %v765
          %v768 = vunpack.c.l.s4 1983009808
          %v769 = vunpack.c.0.s8 %v768
          %v770 = vlaneseq
          %v771 = vshrl.u32 %v770, 7
          %v772 = vsub.s32 %v769, %v771
          %v773 = vrot.slane %v759, %v772
          %v774 = vcombine.low %v750, %v766
          %v775 = vcombine.high %v750, %v766
          %v777 = vunpack.c.l.s4 1934713408
          %v778 = vunpack.c.0.s8 %v777
          %v779 = vlaneseq
          %v780 = vshrl.u32 %v779, 7
          %v781 = vsub.s32 %v778, %v780
          %v782 = vrot.slane %v774, %v781
          %v784 = vunpack.c.l.s4 1934713408
          %v785 = vunpack.c.0.s8 %v784
          %v786 = vlaneseq
          %v787 = vshrl.u32 %v786, 7
          %v788 = vsub.s32 %v785, %v787
          %v789 = vrot.slane %v775, %v788
          %v790 = vcombine.low %v757, %v773
          %v791 = vcombine.high %v757, %v773
          %v793 = vunpack.c.l.s4 1934713408
          %v794 = vunpack.c.0.s8 %v793
          %v795 = vlaneseq
          %v796 = vshrl.u32 %v795, 7
          %v797 = vsub.s32 %v794, %v796
          %v798 = vrot.slane %v790, %v797
          %v800 = vunpack.c.l.s4 1934713408
          %v801 = vunpack.c.0.s8 %v800
          %v802 = vlaneseq
          %v803 = vshrl.u32 %v802, 7
          %v804 = vsub.s32 %v801, %v803
          %v805 = vrot.slane %v791, %v804
          %v806 = vcombine.high %v782, 0.0
          %v807 = vcombine.high %v789, 0.0
          %v808 = vcombine.high %v798, 0.0
          %v809 = vcombine.high %v805, 0.0
          %v810 = vcombine.low %v782, %v789
          %v812 = vunpack.c.l.s4 1983009808
          %v813 = vunpack.c.0.s8 %v812
          %v814 = vlaneseq
          %v815 = vshrl.u32 %v814, 7
          %v816 = vsub.s32 %v813, %v815
          %v817 = vrot.slane %v810, %v816
          %v818 = vcombine.low %v806, %v807
          %v820 = vunpack.c.l.s4 1983009808
          %v821 = vunpack.c.0.s8 %v820
          %v822 = vlaneseq
          %v823 = vshrl.u32 %v822, 7
          %v824 = vsub.s32 %v821, %v823
          %v825 = vrot.slane %v818, %v824
          %v826 = vcombine.low %v798, %v805
          %v828 = vunpack.c.l.s4 1983009808
          %v829 = vunpack.c.0.s8 %v828
          %v830 = vlaneseq
          %v831 = vshrl.u32 %v830, 7
          %v832 = vsub.s32 %v829, %v831
          %v833 = vrot.slane %v826, %v832
          %v834 = vcombine.low %v808, %v809
          %v836 = vunpack.c.l.s4 1983009808
          %v837 = vunpack.c.0.s8 %v836
          %v838 = vlaneseq
          %v839 = vshrl.u32 %v838, 7
          %v840 = vsub.s32 %v837, %v839
          %v841 = vrot.slane %v834, %v840
          %v842 = vcombine.low %v817, %v825
          %v843 = vcombine.high %v817, %v825
          %v845 = vunpack.c.l.s4 1934713408
          %v846 = vunpack.c.0.s8 %v845
          %v847 = vlaneseq
          %v848 = vshrl.u32 %v847, 7
          %v849 = vsub.s32 %v846, %v848
          %v850 = vrot.slane %v842, %v849
          %v852 = vunpack.c.l.s4 1934713408
          %v853 = vunpack.c.0.s8 %v852
          %v854 = vlaneseq
          %v855 = vshrl.u32 %v854, 7
          %v856 = vsub.s32 %v853, %v855
          %v857 = vrot.slane %v843, %v856
          %v858 = vcombine.low %v833, %v841
          %v859 = vcombine.high %v833, %v841
          %v861 = vunpack.c.l.s4 1934713408
          %v862 = vunpack.c.0.s8 %v861
          %v863 = vlaneseq
          %v864 = vshrl.u32 %v863, 7
          %v865 = vsub.s32 %v862, %v864
          %v866 = vrot.slane %v858, %v865
          %v868 = vunpack.c.l.s4 1934713408
          %v869 = vunpack.c.0.s8 %v868
          %v870 = vlaneseq
          %v871 = vshrl.u32 %v870, 7
          %v872 = vsub.s32 %v869, %v871
          %v873 = vrot.slane %v859, %v872
          %v874 = vcombine.low %v850, %v866
          %v875 = vcombine.high %v850, %v866
          %v876 = vcombine.low %v857, %v873
          %v877 = vcombine.high %v857, %v873
          %v878 = vpack.c.bf16 %v874, %v874
          %v879 = vpack.c.bf16 %v875, %v875
          %v880 = vpack.c.bf16 %v876, %v876
          %v881 = vpack.c.bf16 %v877, %v877
          %882 = vst.msk [vmem:[#allocation4] sm:$0xf] %vm562, %v878
          %883 = vst.msk [vmem:[#allocation4 + $0x4] sm:$0xf] %vm562, %v879
          %884 = vst.msk [vmem:[#allocation4 + $0x8] sm:$0xf] %vm562, %v880
          %885 = vst.msk [vmem:[#allocation4 + $0xc] sm:$0xf] %vm562, %v881
        $region60: #{tpu_custom_call.1} parent=43 // pred_fallthru
          _
        %s886 = smul.u32 %s29, 8
        %s887 = sshra.s32 %s886, 3
        %s888 = sand.u32 %s886, 7
        %s889 = smul.addr %s887, 4
        %s890 = scalar_lea.vmem [#allocation2], %s889
        %v891 = vld [vmem:[%s890] sm:$0xf]
        %v892 = vld [vmem:[%s890 + $0x4] sm:$0xf]
        %v893 = vld [vmem:[%s890 + $0x8] sm:$0xf]
        %v894 = vld [vmem:[%s890 + $0xc] sm:$0xf]
        %v895 = vld [vmem:[#allocation3] sm:$0xf]
        %v896 = vld [vmem:[#allocation3 + $0x4] sm:$0xf]
        %v897 = vld [vmem:[#allocation3 + $0x8] sm:$0xf]
        %v898 = vld [vmem:[#allocation3 + $0xc] sm:$0xf]
        %v899 = vld [vmem:[#allocation4] sm:$0xf]
        %v900 = vld [vmem:[#allocation4 + $0x4] sm:$0xf]
        %v901 = vld [vmem:[#allocation4 + $0x8] sm:$0xf]
        %v902 = vld [vmem:[#allocation4 + $0xc] sm:$0xf]
        %v903 = vld [vmem:[%s337] sm:$0xff]
        %vm904 = vcmask 64512
        %v906 = vsel %vm904, %v891, 0
        %v909 = vsel %vm904, %v895, 0
        %911 = vmatprep.subr.bf16.mxu0 0
        %912 = vmatpush1.bf16.xpose.msra.mxu0 %v909
        %913 = vmatprep.subr.bf16.mxu0 0
        %914 = vmatpush1.bf16.xpose.msra.mxu0 0
        %915 = vmatprep.subr.bf16.mxu0 0
        %916 = vmatpush1.bf16.xpose.msra.mxu0 0
        %917 = vmatprep.subr.bf16.mxu0 0
        %918 = vmatpush1.bf16.xpose.msra.mxu0 0
        %919 = vmatprep.subr.bf16.mxu0 0
        %920 = vmatpush1.bf16.xpose.msra.mxu0 0
        %921 = vmatprep.subr.bf16.mxu0 0
        %922 = vmatpush1.bf16.xpose.msra.mxu0 0
        %923 = vmatprep.subr.bf16.mxu0 0
        %924 = vmatpush1.bf16.xpose.msra.mxu0 0
        %925 = vmatprep.subr.bf16.mxu0 0
        %926 = vmatpush1.bf16.xpose.msra.mxu0 0
        %927 = vmatprep.subr.bf16.mxu0 0
        %928 = vmatpush1.bf16.xpose.msra.mxu0 0
        %929 = vmatprep.subr.bf16.mxu0 0
        %930 = vmatpush1.bf16.xpose.msra.mxu0 0
        %931 = vmatprep.subr.bf16.mxu0 0
        %932 = vmatpush1.bf16.xpose.msra.mxu0 0
        %933 = vmatprep.subr.bf16.mxu0 0
        %934 = vmatpush1.bf16.xpose.msra.mxu0 0
        %935 = vmatprep.subr.bf16.mxu0 0
        %936 = vmatpush1.bf16.xpose.msra.mxu0 0
        %937 = vmatprep.subr.bf16.mxu0 0
        %938 = vmatpush1.bf16.xpose.msra.mxu0 0
        %939 = vmatprep.subr.bf16.mxu0 0
        %940 = vmatpush1.bf16.xpose.msra.mxu0 0
        %941 = vmatprep.subr.bf16.mxu0 0
        %942 = vmatpush1.bf16.xpose.msra.mxu0 0
        %943 = vmatprep.mubr.bf16.mxu0 0
        %944 = vmatmul.mubr.bf16.gmra.mrb[0].mxu0 %v906
        %v945 = vpop.f32.mrb[0].mxu0
        %v946 = vadd.f32 %v903, %v945
        %v947 = vpop.f32.mrb[0].mxu0
        %v948 = vpop.f32.mrb[0].mxu0
        %v949 = vpop.f32.mrb[0].mxu0
        %950 = vdwg.mxu0
        %v952 = vsel %vm904, %v892, 0
        %v955 = vsel %vm904, %v896, 0
        %957 = vmatprep.subr.bf16.mxu0 0
        %958 = vmatpush1.bf16.xpose.msra.mxu0 %v955
        %959 = vmatprep.subr.bf16.mxu0 0
        %960 = vmatpush1.bf16.xpose.msra.mxu0 0
        %961 = vmatprep.subr.bf16.mxu0 0
        %962 = vmatpush1.bf16.xpose.msra.mxu0 0
        %963 = vmatprep.subr.bf16.mxu0 0
        %964 = vmatpush1.bf16.xpose.msra.mxu0 0
        %965 = vmatprep.subr.bf16.mxu0 0
        %966 = vmatpush1.bf16.xpose.msra.mxu0 0
        %967 = vmatprep.subr.bf16.mxu0 0
        %968 = vmatpush1.bf16.xpose.msra.mxu0 0
        %969 = vmatprep.subr.bf16.mxu0 0
        %970 = vmatpush1.bf16.xpose.msra.mxu0 0
        %971 = vmatprep.subr.bf16.mxu0 0
        %972 = vmatpush1.bf16.xpose.msra.mxu0 0
        %973 = vmatprep.subr.bf16.mxu0 0
        %974 = vmatpush1.bf16.xpose.msra.mxu0 0
        %975 = vmatprep.subr.bf16.mxu0 0
        %976 = vmatpush1.bf16.xpose.msra.mxu0 0
        %977 = vmatprep.subr.bf16.mxu0 0
        %978 = vmatpush1.bf16.xpose.msra.mxu0 0
        %979 = vmatprep.subr.bf16.mxu0 0
        %980 = vmatpush1.bf16.xpose.msra.mxu0 0
        %981 = vmatprep.subr.bf16.mxu0 0
        %982 = vmatpush1.bf16.xpose.msra.mxu0 0
        %983 = vmatprep.subr.bf16.mxu0 0
        %984 = vmatpush1.bf16.xpose.msra.mxu0 0
        %985 = vmatprep.subr.bf16.mxu0 0
        %986 = vmatpush1.bf16.xpose.msra.mxu0 0
        %987 = vmatprep.subr.bf16.mxu0 0
        %988 = vmatpush1.bf16.xpose.msra.mxu0 0
        %989 = vmatprep.mubr.bf16.mxu0 0
        %990 = vmatmul.mubr.bf16.gmra.mrb[0].mxu0 %v952
        %v991 = vpop.f32.mrb[0].mxu0
        %v992 = vadd.f32 %v903, %v991
        %v993 = vpop.f32.mrb[0].mxu0
        %v994 = vpop.f32.mrb[0].mxu0
        %v995 = vpop.f32.mrb[0].mxu0
        %996 = vdwg.mxu0
        %v998 = vsel %vm904, %v893, 0
        %v1001 = vsel %vm904, %v897, 0
        %1003 = vmatprep.subr.bf16.mxu0 0
        %1004 = vmatpush1.bf16.xpose.msra.mxu0 %v1001
        %1005 = vmatprep.subr.bf16.mxu0 0
        %1006 = vmatpush1.bf16.xpose.msra.mxu0 0
        %1007 = vmatprep.subr.bf16.mxu0 0
        %1008 = vmatpush1.bf16.xpose.msra.mxu0 0
        %1009 = vmatprep.subr.bf16.mxu0 0
        %1010 = vmatpush1.bf16.xpose.msra.mxu0 0
        %1011 = vmatprep.subr.bf16.mxu0 0
        %1012 = vmatpush1.bf16.xpose.msra.mxu0 0
        %1013 = vmatprep.subr.bf16.mxu0 0
        %1014 = vmatpush1.bf16.xpose.msra.mxu0 0
        %1015 = vmatprep.subr.bf16.mxu0 0
        %1016 = vmatpush1.bf16.xpose.msra.mxu0 0
        %1017 = vmatprep.subr.bf16.mxu0 0
        %1018 = vmatpush1.bf16.xpose.msra.mxu0 0
        %1019 = vmatprep.subr.bf16.mxu0 0
        %1020 = vmatpush1.bf16.xpose.msra.mxu0 0
        %1021 = vmatprep.subr.bf16.mxu0 0
        %1022 = vmatpush1.bf16.xpose.msra.mxu0 0
        %1023 = vmatprep.subr.bf16.mxu0 0
        %1024 = vmatpush1.bf16.xpose.msra.mxu0 0
        %1025 = vmatprep.subr.bf16.mxu0 0
        %1026 = vmatpush1.bf16.xpose.msra.mxu0 0
        %1027 = vmatprep.subr.bf16.mxu0 0
        %1028 = vmatpush1.bf16.xpose.msra.mxu0 0
        %1029 = vmatprep.subr.bf16.mxu0 0
        %1030 = vmatpush1.bf16.xpose.msra.mxu0 0
        %1031 = vmatprep.subr.bf16.mxu0 0
        %1032 = vmatpush1.bf16.xpose.msra.mxu0 0
        %1033 = vmatprep.subr.bf16.mxu0 0
        %1034 = vmatpush1.bf16.xpose.msra.mxu0 0
        %1035 = vmatprep.mubr.bf16.mxu0 0
        %1036 = vmatmul.mubr.bf16.gmra.mrb[0].mxu0 %v998
        %v1037 = vpop.f32.mrb[0].mxu0
        %v1038 = vadd.f32 %v903, %v1037
        %v1039 = vpop.f32.mrb[0].mxu0
        %v1040 = vpop.f32.mrb[0].mxu0
        %v1041 = vpop.f32.mrb[0].mxu0
        %1042 = vdwg.mxu0
        %v1044 = vsel %vm904, %v894, 0
        %v1047 = vsel %vm904, %v898, 0
        %1049 = vmatprep.subr.bf16.mxu0 0
        %1050 = vmatpush1.bf16.xpose.msra.mxu0 %v1047
        %1051 = vmatprep.subr.bf16.mxu0 0
        %1052 = vmatpush1.bf16.xpose.msra.mxu0 0
        %1053 = vmatprep.subr.bf16.mxu0 0
        %1054 = vmatpush1.bf16.xpose.msra.mxu0 0
        %1055 = vmatprep.subr.bf16.mxu0 0
        %1056 = vmatpush1.bf16.xpose.msra.mxu0 0
        %1057 = vmatprep.subr.bf16.mxu0 0
        %1058 = vmatpush1.bf16.xpose.msra.mxu0 0
        %1059 = vmatprep.subr.bf16.mxu0 0
        %1060 = vmatpush1.bf16.xpose.msra.mxu0 0
        %1061 = vmatprep.subr.bf16.mxu0 0
        %1062 = vmatpush1.bf16.xpose.msra.mxu0 0
        %1063 = vmatprep.subr.bf16.mxu0 0
        %1064 = vmatpush1.bf16.xpose.msra.mxu0 0
        %1065 = vmatprep.subr.bf16.mxu0 0
        %1066 = vmatpush1.bf16.xpose.msra.mxu0 0
        %1067 = vmatprep.subr.bf16.mxu0 0
        %1068 = vmatpush1.bf16.xpose.msra.mxu0 0
        %1069 = vmatprep.subr.bf16.mxu0 0
        %1070 = vmatpush1.bf16.xpose.msra.mxu0 0
        %1071 = vmatprep.subr.bf16.mxu0 0
        %1072 = vmatpush1.bf16.xpose.msra.mxu0 0
        %1073 = vmatprep.subr.bf16.mxu0 0
        %1074 = vmatpush1.bf16.xpose.msra.mxu0 0
        %1075 = vmatprep.subr.bf16.mxu0 0
        %1076 = vmatpush1.bf16.xpose.msra.mxu0 0
        %1077 = vmatprep.subr.bf16.mxu0 0
        %1078 = vmatpush1.bf16.xpose.msra.mxu0 0
        %1079 = vmatprep.subr.bf16.mxu0 0
        %1080 = vmatpush1.bf16.xpose.msra.mxu0 0
        %1081 = vmatprep.mubr.bf16.mxu0 0
        %1082 = vmatmul.mubr.bf16.gmra.mrb[0].mxu0 %v1044
        %v1083 = vpop.f32.mrb[0].mxu0
        %v1084 = vadd.f32 %v903, %v1083
        %v1085 = vpop.f32.mrb[0].mxu0
        %v1086 = vpop.f32.mrb[0].mxu0
        %v1087 = vpop.f32.mrb[0].mxu0
        %1088 = vdwg.mxu0
        %v1089 = vsel %vm904, %v946, -inf
        %1090 = vmax.xlane.f32.xlu0 %v1089
        %v1091 = vpop.xlane.xlu0 %1090
        %v1092 = vsel %vm904, %v992, -inf
        %1093 = vmax.xlane.f32.xlu0 %v1092
        %v1094 = vpop.xlane.xlu0 %1093
        %v1095 = vsel %vm904, %v1038, -inf
        %1096 = vmax.xlane.f32.xlu0 %v1095
        %v1097 = vpop.xlane.xlu0 %1096
        %v1098 = vsel %vm904, %v1084, -inf
        %1099 = vmax.xlane.f32.xlu0 %v1098
        %v1100 = vpop.xlane.xlu0 %1099
        %v1101 = vsub.f32 %v946, %v1091
        %v1102 = vsub.f32 %v992, %v1094
        %v1103 = vsub.f32 %v1038, %v1097
        %v1104 = vsub.f32 %v1084, %v1100
        %v1105 = vmul.f32 %v1101, 1.442695
        %v1106 = vpow.pop %v1105
        %v1107 = vmul.f32 %v1102, 1.442695
        %v1108 = vpow.pop %v1107
        %v1109 = vmul.f32 %v1103, 1.442695
        %v1110 = vpow.pop %v1109
        %v1111 = vmul.f32 %v1104, 1.442695
        %v1112 = vpow.pop %v1111
        %v1113 = vsel %vm904, %v1106, 0.0
        %1114 = vadd.xlane.f32.xlu0 %v1113
        %v1115 = vpop.xlane.xlu0 %1114
        %v1116 = vsel %vm904, %v1108, 0.0
        %1117 = vadd.xlane.f32.xlu0 %v1116
        %v1118 = vpop.xlane.xlu0 %1117
        %v1119 = vsel %vm904, %v1110, 0.0
        %1120 = vadd.xlane.f32.xlu0 %v1119
        %v1121 = vpop.xlane.xlu0 %1120
        %v1122 = vsel %vm904, %v1112, 0.0
        %1123 = vadd.xlane.f32.xlu0 %v1122
        %v1124 = vpop.xlane.xlu0 %1123
        %v1125 = vrcp.pop %v1115
        %v1126 = vrcp.pop %v1118
        %v1127 = vrcp.pop %v1121
        %v1128 = vrcp.pop %v1124
        %v1129 = vmul.f32 %v1106, %v1125
        %v1130 = vmul.f32 %v1108, %v1126
        %v1131 = vmul.f32 %v1110, %v1127
        %v1132 = vmul.f32 %v1112, %v1128
        %v1133 = vpack.c.bf16 %v1129, %v1129
        %v1134 = vpack.c.bf16 %v1130, %v1130
        %v1135 = vpack.c.bf16 %v1131, %v1131
        %v1136 = vpack.c.bf16 %v1132, %v1132
        %v1138 = vsel %vm904, %v1133, 0
        %vm1140 = vcmask 1043456
        %v1142 = vsel %vm1140, %v899, 0
        %1144 = vmatprep.subr.bf16.mxu0 0
        %1145 = vmatpush1.bf16.msra.mxu0 %v1142
        %1146 = vmatprep.subr.bf16.mxu0 0
        %1147 = vmatpush1.bf16.msra.mxu0 0
        %1148 = vmatprep.subr.bf16.mxu0 0
        %1149 = vmatpush1.bf16.msra.mxu0 0
        %1150 = vmatprep.subr.bf16.mxu0 0
        %1151 = vmatpush1.bf16.msra.mxu0 0
        %1152 = vmatprep.subr.bf16.mxu0 0
        %1153 = vmatpush1.bf16.msra.mxu0 0
        %1154 = vmatprep.subr.bf16.mxu0 0
        %1155 = vmatpush1.bf16.msra.mxu0 0
        %1156 = vmatprep.subr.bf16.mxu0 0
        %1157 = vmatpush1.bf16.msra.mxu0 0
        %1158 = vmatprep.subr.bf16.mxu0 0
        %1159 = vmatpush1.bf16.msra.mxu0 0
        %1160 = vmatprep.subr.bf16.mxu0 0
        %1161 = vmatpush1.bf16.msra.mxu0 0
        %1162 = vmatprep.subr.bf16.mxu0 0
        %1163 = vmatpush1.bf16.msra.mxu0 0
        %1164 = vmatprep.subr.bf16.mxu0 0
        %1165 = vmatpush1.bf16.msra.mxu0 0
        %1166 = vmatprep.subr.bf16.mxu0 0
        %1167 = vmatpush1.bf16.msra.mxu0 0
        %1168 = vmatprep.subr.bf16.mxu0 0
        %1169 = vmatpush1.bf16.msra.mxu0 0
        %1170 = vmatprep.subr.bf16.mxu0 0
        %1171 = vmatpush1.bf16.msra.mxu0 0
        %1172 = vmatprep.subr.bf16.mxu0 0
        %1173 = vmatpush1.bf16.msra.mxu0 0
        %1174 = vmatprep.subr.bf16.mxu0 0
        %1175 = vmatpush1.bf16.msra.mxu0 0
        %1176 = vmatprep.mubr.bf16.mxu0 0
        %1177 = vmatmul.mubr.bf16.gmra.mrb[0].mxu0 %v1138
        %v1178 = vpop.f32.mrb[0].mxu0
        %v1179 = vadd.f32 0.0, %v1178
        %v1180 = vpop.f32.mrb[0].mxu0
        %v1181 = vpop.f32.mrb[0].mxu0
        %v1182 = vpop.f32.mrb[0].mxu0
        %1183 = vdwg.mxu0
        %v1185 = vsel %vm904, %v1134, 0
        %v1188 = vsel %vm1140, %v900, 0
        %1190 = vmatprep.subr.bf16.mxu0 0
        %1191 = vmatpush1.bf16.msra.mxu0 %v1188
        %1192 = vmatprep.subr.bf16.mxu0 0
        %1193 = vmatpush1.bf16.msra.mxu0 0
        %1194 = vmatprep.subr.bf16.mxu0 0
        %1195 = vmatpush1.bf16.msra.mxu0 0
        %1196 = vmatprep.subr.bf16.mxu0 0
        %1197 = vmatpush1.bf16.msra.mxu0 0
        %1198 = vmatprep.subr.bf16.mxu0 0
        %1199 = vmatpush1.bf16.msra.mxu0 0
        %1200 = vmatprep.subr.bf16.mxu0 0
        %1201 = vmatpush1.bf16.msra.mxu0 0
        %1202 = vmatprep.subr.bf16.mxu0 0
        %1203 = vmatpush1.bf16.msra.mxu0 0
        %1204 = vmatprep.subr.bf16.mxu0 0
        %1205 = vmatpush1.bf16.msra.mxu0 0
        %1206 = vmatprep.subr.bf16.mxu0 0
        %1207 = vmatpush1.bf16.msra.mxu0 0
        %1208 = vmatprep.subr.bf16.mxu0 0
        %1209 = vmatpush1.bf16.msra.mxu0 0
        %1210 = vmatprep.subr.bf16.mxu0 0
        %1211 = vmatpush1.bf16.msra.mxu0 0
        %1212 = vmatprep.subr.bf16.mxu0 0
        %1213 = vmatpush1.bf16.msra.mxu0 0
        %1214 = vmatprep.subr.bf16.mxu0 0
        %1215 = vmatpush1.bf16.msra.mxu0 0
        %1216 = vmatprep.subr.bf16.mxu0 0
        %1217 = vmatpush1.bf16.msra.mxu0 0
        %1218 = vmatprep.subr.bf16.mxu0 0
        %1219 = vmatpush1.bf16.msra.mxu0 0
        %1220 = vmatprep.subr.bf16.mxu0 0
        %1221 = vmatpush1.bf16.msra.mxu0 0
        %1222 = vmatprep.mubr.bf16.mxu0 0
        %1223 = vmatmul.mubr.bf16.gmra.mrb[0].mxu0 %v1185
        %v1224 = vpop.f32.mrb[0].mxu0
        %v1225 = vadd.f32 0.0, %v1224
        %v1226 = vpop.f32.mrb[0].mxu0
        %v1227 = vpop.f32.mrb[0].mxu0
        %v1228 = vpop.f32.mrb[0].mxu0
        %1229 = vdwg.mxu0
        %v1231 = vsel %vm904, %v1135, 0
        %v1234 = vsel %vm1140, %v901, 0
        %1236 = vmatprep.subr.bf16.mxu0 0
        %1237 = vmatpush1.bf16.msra.mxu0 %v1234
        %1238 = vmatprep.subr.bf16.mxu0 0
        %1239 = vmatpush1.bf16.msra.mxu0 0
        %1240 = vmatprep.subr.bf16.mxu0 0
        %1241 = vmatpush1.bf16.msra.mxu0 0
        %1242 = vmatprep.subr.bf16.mxu0 0
        %1243 = vmatpush1.bf16.msra.mxu0 0
        %1244 = vmatprep.subr.bf16.mxu0 0
        %1245 = vmatpush1.bf16.msra.mxu0 0
        %1246 = vmatprep.subr.bf16.mxu0 0
        %1247 = vmatpush1.bf16.msra.mxu0 0
        %1248 = vmatprep.subr.bf16.mxu0 0
        %1249 = vmatpush1.bf16.msra.mxu0 0
        %1250 = vmatprep.subr.bf16.mxu0 0
        %1251 = vmatpush1.bf16.msra.mxu0 0
        %1252 = vmatprep.subr.bf16.mxu0 0
        %1253 = vmatpush1.bf16.msra.mxu0 0
        %1254 = vmatprep.subr.bf16.mxu0 0
        %1255 = vmatpush1.bf16.msra.mxu0 0
        %1256 = vmatprep.subr.bf16.mxu0 0
        %1257 = vmatpush1.bf16.msra.mxu0 0
        %1258 = vmatprep.subr.bf16.mxu0 0
        %1259 = vmatpush1.bf16.msra.mxu0 0
        %1260 = vmatprep.subr.bf16.mxu0 0
        %1261 = vmatpush1.bf16.msra.mxu0 0
        %1262 = vmatprep.subr.bf16.mxu0 0
        %1263 = vmatpush1.bf16.msra.mxu0 0
        %1264 = vmatprep.subr.bf16.mxu0 0
        %1265 = vmatpush1.bf16.msra.mxu0 0
        %1266 = vmatprep.subr.bf16.mxu0 0
        %1267 = vmatpush1.bf16.msra.mxu0 0
        %1268 = vmatprep.mubr.bf16.mxu0 0
        %1269 = vmatmul.mubr.bf16.gmra.mrb[0].mxu0 %v1231
        %v1270 = vpop.f32.mrb[0].mxu0
        %v1271 = vadd.f32 0.0, %v1270
        %v1272 = vpop.f32.mrb[0].mxu0
        %v1273 = vpop.f32.mrb[0].mxu0
        %v1274 = vpop.f32.mrb[0].mxu0
        %1275 = vdwg.mxu0
        %v1277 = vsel %vm904, %v1136, 0
        %v1280 = vsel %vm1140, %v902, 0
        %1282 = vmatprep.subr.bf16.mxu0 0
        %1283 = vmatpush1.bf16.msra.mxu0 %v1280
        %1284 = vmatprep.subr.bf16.mxu0 0
        %1285 = vmatpush1.bf16.msra.mxu0 0
        %1286 = vmatprep.subr.bf16.mxu0 0
        %1287 = vmatpush1.bf16.msra.mxu0 0
        %1288 = vmatprep.subr.bf16.mxu0 0
        %1289 = vmatpush1.bf16.msra.mxu0 0
        %1290 = vmatprep.subr.bf16.mxu0 0
        %1291 = vmatpush1.bf16.msra.mxu0 0
        %1292 = vmatprep.subr.bf16.mxu0 0
        %1293 = vmatpush1.bf16.msra.mxu0 0
        %1294 = vmatprep.subr.bf16.mxu0 0
        %1295 = vmatpush1.bf16.msra.mxu0 0
        %1296 = vmatprep.subr.bf16.mxu0 0
        %1297 = vmatpush1.bf16.msra.mxu0 0
        %1298 = vmatprep.subr.bf16.mxu0 0
        %1299 = vmatpush1.bf16.msra.mxu0 0
        %1300 = vmatprep.subr.bf16.mxu0 0
        %1301 = vmatpush1.bf16.msra.mxu0 0
        %1302 = vmatprep.subr.bf16.mxu0 0
        %1303 = vmatpush1.bf16.msra.mxu0 0
        %1304 = vmatprep.subr.bf16.mxu0 0
        %1305 = vmatpush1.bf16.msra.mxu0 0
        %1306 = vmatprep.subr.bf16.mxu0 0
        %1307 = vmatpush1.bf16.msra.mxu0 0
        %1308 = vmatprep.subr.bf16.mxu0 0
        %1309 = vmatpush1.bf16.msra.mxu0 0
        %1310 = vmatprep.subr.bf16.mxu0 0
        %1311 = vmatpush1.bf16.msra.mxu0 0
        %1312 = vmatprep.subr.bf16.mxu0 0
        %1313 = vmatpush1.bf16.msra.mxu0 0
        %1314 = vmatprep.mubr.bf16.mxu0 0
        %1315 = vmatmul.mubr.bf16.gmra.mrb[0].mxu0 %v1277
        %v1316 = vpop.f32.mrb[0].mxu0
        %v1317 = vadd.f32 0.0, %v1316
        %v1318 = vpop.f32.mrb[0].mxu0
        %v1319 = vpop.f32.mrb[0].mxu0
        %v1320 = vpop.f32.mrb[0].mxu0
        %1321 = vdwg.mxu0
        %v1322 = vcombine.low %v1179, %v1271
        %v1323 = vcombine.high %v1179, %v1271
        %v1325 = vunpack.c.l.s4 1983009808
        %v1326 = vunpack.c.0.s8 %v1325
        %v1327 = vlaneseq
        %v1328 = vshrl.u32 %v1327, 7
        %v1329 = vsub.s32 %v1326, %v1328
        %v1330 = vrot.slane %v1322, %v1329
        %v1332 = vunpack.c.l.s4 1983009808
        %v1333 = vunpack.c.0.s8 %v1332
        %v1334 = vlaneseq
        %v1335 = vshrl.u32 %v1334, 7
        %v1336 = vsub.s32 %v1333, %v1335
        %v1337 = vrot.slane %v1323, %v1336
        %v1338 = vcombine.low %v1225, %v1317
        %v1339 = vcombine.high %v1225, %v1317
        %v1341 = vunpack.c.l.s4 1983009808
        %v1342 = vunpack.c.0.s8 %v1341
        %v1343 = vlaneseq
        %v1344 = vshrl.u32 %v1343, 7
        %v1345 = vsub.s32 %v1342, %v1344
        %v1346 = vrot.slane %v1338, %v1345
        %v1348 = vunpack.c.l.s4 1983009808
        %v1349 = vunpack.c.0.s8 %v1348
        %v1350 = vlaneseq
        %v1351 = vshrl.u32 %v1350, 7
        %v1352 = vsub.s32 %v1349, %v1351
        %v1353 = vrot.slane %v1339, %v1352
        %v1354 = vcombine.low %v1330, %v1346
        %v1355 = vcombine.high %v1330, %v1346
        %v1357 = vunpack.c.l.s4 1934713408
        %v1358 = vunpack.c.0.s8 %v1357
        %v1359 = vlaneseq
        %v1360 = vshrl.u32 %v1359, 7
        %v1361 = vsub.s32 %v1358, %v1360
        %v1362 = vrot.slane %v1354, %v1361
        %v1364 = vunpack.c.l.s4 1934713408
        %v1365 = vunpack.c.0.s8 %v1364
        %v1366 = vlaneseq
        %v1367 = vshrl.u32 %v1366, 7
        %v1368 = vsub.s32 %v1365, %v1367
        %v1369 = vrot.slane %v1355, %v1368
        %v1370 = vcombine.low %v1337, %v1353
        %v1371 = vcombine.high %v1337, %v1353
        %v1373 = vunpack.c.l.s4 1934713408
        %v1374 = vunpack.c.0.s8 %v1373
        %v1375 = vlaneseq
        %v1376 = vshrl.u32 %v1375, 7
        %v1377 = vsub.s32 %v1374, %v1376
        %v1378 = vrot.slane %v1370, %v1377
        %v1380 = vunpack.c.l.s4 1934713408
        %v1381 = vunpack.c.0.s8 %v1380
        %v1382 = vlaneseq
        %v1383 = vshrl.u32 %v1382, 7
        %v1384 = vsub.s32 %v1381, %v1383
        %v1385 = vrot.slane %v1371, %v1384
        %v1386 = vcombine.high %v1362, 0.0
        %v1387 = vcombine.high %v1369, 0.0
        %v1388 = vcombine.high %v1378, 0.0
        %v1389 = vcombine.high %v1385, 0.0
        %v1390 = vcombine.low %v1362, %v1369
        %v1392 = vunpack.c.l.s4 1983009808
        %v1393 = vunpack.c.0.s8 %v1392
        %v1394 = vlaneseq
        %v1395 = vshrl.u32 %v1394, 7
        %v1396 = vsub.s32 %v1393, %v1395
        %v1397 = vrot.slane %v1390, %v1396
        %v1398 = vcombine.low %v1386, %v1387
        %v1400 = vunpack.c.l.s4 1983009808
        %v1401 = vunpack.c.0.s8 %v1400
        %v1402 = vlaneseq
        %v1403 = vshrl.u32 %v1402, 7
        %v1404 = vsub.s32 %v1401, %v1403
        %v1405 = vrot.slane %v1398, %v1404
        %v1406 = vcombine.low %v1378, %v1385
        %v1408 = vunpack.c.l.s4 1983009808
        %v1409 = vunpack.c.0.s8 %v1408
        %v1410 = vlaneseq
        %v1411 = vshrl.u32 %v1410, 7
        %v1412 = vsub.s32 %v1409, %v1411
        %v1413 = vrot.slane %v1406, %v1412
        %v1414 = vcombine.low %v1388, %v1389
        %v1416 = vunpack.c.l.s4 1983009808
        %v1417 = vunpack.c.0.s8 %v1416
        %v1418 = vlaneseq
        %v1419 = vshrl.u32 %v1418, 7
        %v1420 = vsub.s32 %v1417, %v1419
        %v1421 = vrot.slane %v1414, %v1420
        %v1422 = vcombine.low %v1397, %v1405
        %v1423 = vcombine.high %v1397, %v1405
        %v1425 = vunpack.c.l.s4 1934713408
        %v1426 = vunpack.c.0.s8 %v1425
        %v1427 = vlaneseq
        %v1428 = vshrl.u32 %v1427, 7
        %v1429 = vsub.s32 %v1426, %v1428
        %v1430 = vrot.slane %v1422, %v1429
        %v1432 = vunpack.c.l.s4 1934713408
        %v1433 = vunpack.c.0.s8 %v1432
        %v1434 = vlaneseq
        %v1435 = vshrl.u32 %v1434, 7
        %v1436 = vsub.s32 %v1433, %v1435
        %v1437 = vrot.slane %v1423, %v1436
        %v1438 = vcombine.low %v1413, %v1421
        %v1439 = vcombine.high %v1413, %v1421
        %v1441 = vunpack.c.l.s4 1934713408
        %v1442 = vunpack.c.0.s8 %v1441
        %v1443 = vlaneseq
        %v1444 = vshrl.u32 %v1443, 7
        %v1445 = vsub.s32 %v1442, %v1444
        %v1446 = vrot.slane %v1438, %v1445
        %v1448 = vunpack.c.l.s4 1934713408
        %v1449 = vunpack.c.0.s8 %v1448
        %v1450 = vlaneseq
        %v1451 = vshrl.u32 %v1450, 7
        %v1452 = vsub.s32 %v1449, %v1451
        %v1453 = vrot.slane %v1439, %v1452
        %v1454 = vcombine.low %v1430, %v1446
        %v1455 = vcombine.high %v1430, %v1446
        %v1456 = vcombine.low %v1437, %v1453
        %v1457 = vcombine.high %v1437, %v1453
        %1459 = vrot.lane.b32.xlu0 %v1455, 8
        %v1460 = vpop.permute.xlu0 %1459
        %1463 = vrot.lane.b32.xlu0 %v1456, 16
        %v1464 = vpop.permute.xlu0 %1463
        %1467 = vrot.lane.b32.xlu0 %v1457, 24
        %v1468 = vpop.permute.xlu0 %1467
        %v1470 = vsel %vm904, %v1454, %v1460
        %vm1471 = vcmask 130048
        %v1472 = vsel %vm1471, %v1470, %v1464
        %vm1473 = vcmask 195584
        %v1474 = vsel %vm1473, %v1472, %v1468
        %v1475 = vpack.c.bf16 %v1474, %v1474
        %v1476 = vld [vmem:[#allocation10] sm:$0xf]
        %v1477 = vld [vmem:[#allocation10 + $0x4] sm:$0xf]
        %v1478 = vld [vmem:[#allocation10 + $0x8] sm:$0xf]
        %v1479 = vld [vmem:[#allocation10 + $0xc] sm:$0xf]
        %v1480 = vld [vmem:[%s4] sm:$0x1]
        %v1482 = vlaneseq
        %v1483 = vshrl.u32 %v1482, 7
        %v1484 = vsub.s32 0, %v1483
        %v1485 = vrot.slane %v1480, %v1484
        %v1491 = vunpack.c.l.b16 %v1476
        %v1492 = vunpack.c.l.b16 %v1477
        %v1493 = vunpack.c.l.b16 %v1478
        %v1494 = vunpack.c.l.b16 %v1479
        %v1495 = vpack.c.b16 %v1492, %v1491
        %v1496 = vpack.c.b16 %v1494, %v1493
        %vm1499 = vcmask 261120
        %v1501 = vsel %vm1499, %v1475, 0
        %1503 = vmatprep.subr.bf16.mxu0 0
        %1504 = vmatpush1.bf16.msra.mxu0 %v1495
        %1505 = vmatprep.subr.bf16.mxu0 0
        %1506 = vmatpush1.bf16.msra.mxu0 %v1496
        %1507 = vmatprep.subr.bf16.mxu0 0
        %1508 = vmatpush1.bf16.msra.mxu0 0
        %1509 = vmatprep.subr.bf16.mxu0 0
        %1510 = vmatpush1.bf16.msra.mxu0 0
        %1511 = vmatprep.subr.bf16.mxu0 0
        %1512 = vmatpush1.bf16.msra.mxu0 0
        %1513 = vmatprep.subr.bf16.mxu0 0
        %1514 = vmatpush1.bf16.msra.mxu0 0
        %1515 = vmatprep.subr.bf16.mxu0 0
        %1516 = vmatpush1.bf16.msra.mxu0 0
        %1517 = vmatprep.subr.bf16.mxu0 0
        %1518 = vmatpush1.bf16.msra.mxu0 0
        %1519 = vmatprep.subr.bf16.mxu0 0
        %1520 = vmatpush1.bf16.msra.mxu0 0
        %1521 = vmatprep.subr.bf16.mxu0 0
        %1522 = vmatpush1.bf16.msra.mxu0 0
        %1523 = vmatprep.subr.bf16.mxu0 0
        %1524 = vmatpush1.bf16.msra.mxu0 0
        %1525 = vmatprep.subr.bf16.mxu0 0
        %1526 = vmatpush1.bf16.msra.mxu0 0
        %1527 = vmatprep.subr.bf16.mxu0 0
        %1528 = vmatpush1.bf16.msra.mxu0 0
        %1529 = vmatprep.subr.bf16.mxu0 0
        %1530 = vmatpush1.bf16.msra.mxu0 0
        %1531 = vmatprep.subr.bf16.mxu0 0
        %1532 = vmatpush1.bf16.msra.mxu0 0
        %1533 = vmatprep.subr.bf16.mxu0 0
        %1534 = vmatpush1.bf16.msra.mxu0 0
        %1535 = vmatprep.mubr.bf16.mxu0 0
        %1536 = vmatmul.mubr.bf16.gmra.mrb[0].mxu0 %v1501
        %v1537 = vpop.f32.mrb[0].mxu0
        %v1538 = vadd.f32 %v1485, %v1537
        %v1539 = vpop.f32.mrb[0].mxu0
        %v1540 = vpop.f32.mrb[0].mxu0
        %v1541 = vpop.f32.mrb[0].mxu0
        %1542 = vdwg.mxu0
        %1543 = vst.msk [vmem:[%s330] sm:$0xff] %vm1499, %v1538
        %s1544 = sand.u32 %s184, 1
        %s1545 = scalar_lea.sflag [#allocation7], %s1544
        %s1546 = sand.u32 %s184, 1
        %s1547 = smul.addr %s1546, 8
        %s1548 = scalar_lea.vmem [#allocation11], %s1547
        // Predicated region
        $region61: #{tpu_custom_call.1} parent=43 // pred_check
          %p1549 = pneg %p194
        $region62: #{tpu_custom_call.1} parent=43 // pred_check_branch
          %1551 = sbr.rel (%p1549) target = $region64
        $region63: #{tpu_custom_call.1} parent=43 // pred_region
          %s1553 = ssub.s32 128, 128
          %1554 = vsyncadd %s1545, %s1553
          %s1555 = sadd.s32 %s29, %s28
          %s1556 = smul.addr %s1555, 128
          %s1557 = scalar_lea.hbm %s6, %s1556
          %s1559 = sshll.u32 %s1548, 4
          %s1560 = int_to_ptr.vmem [resolvable:$true] %s1559
          %1562 = dma.vmem_to_hbm [thread:$0]  %s1560, 128, %s1557, %s1545
        $region64: #{tpu_custom_call.1} parent=43 // pred_fallthru
          _
      $region44: #{tpu_custom_call.1} parent=5 // pred_fallthru
        _
      %p1563 = scmp.le.s32.totalorder 2, %s19
      // Predicated region
      $region65: #{tpu_custom_call.1} parent=5 // pred_check
        %p1564 = pneg %p1563
      $region66: #{tpu_custom_call.1} parent=5 // pred_check_branch
        %1566 = sbr.rel (%p1564) target = $region68
      $region67: #{tpu_custom_call.1} parent=5 // pred_region
        %s1567 = ssub.s32 %s19, 2
        // Predicated region
        $region69: #{tpu_custom_call.1} parent=67 // pred_check
          %p1568 = pneg %p200
        $region70: #{tpu_custom_call.1} parent=67 // pred_check_branch
          %1570 = sbr.rel (%p1568) target = $region72
        $region71: #{tpu_custom_call.1} parent=67 // pred_region
          %s1571 = sand.u32 %s185, 1
          %s1572 = scalar_lea.sflag [#allocation7], %s1571
          %s1573 = sand.u32 %s185, 1
          %s1574 = smul.addr %s1573, 8
          %s1575 = scalar_lea.vmem [#allocation11], %s1574
          %1576 = dma.done %s1572, 128
        $region72: #{tpu_custom_call.1} parent=67 // pred_fallthru
          _
      $region68: #{tpu_custom_call.1} parent=5 // pred_fallthru
        _
    $region6: #{tpu_custom_call.1} parent=1 // loop_footer
      %s23 = sadd.s32 1, %s19
    $region7: #{tpu_custom_call.1} parent=1 // loop_footer_branch
      %18 = sbr.rel target = $region3
    $region8: #{tpu_custom_call.1} parent=1 // loop_exit
      _
    %1577 = vsyncpa [#allocation6], 1
    %s1578 = scalar_lea.sflag [#allocation6], 1
    %1579 = vsyncpa %s1578, 1
    %1580 = vsyncpa [#allocation9], 1
    %1581 = vsyncpa [#allocation7], 1
    %s1582 = scalar_lea.sflag [#allocation7], 1
    %1583 = vsyncpa %s1582, 1

</llo_original>
